<compile_context>
chip_gen: v5e
topology: v5e:2x2
jax: 0.10.0
libtpu: 0.0.40
codegen_flags: <defaults>
</compile_context>

<pallas_src>
import functools

import jax
import jax.numpy as jnp
from jax.experimental import pallas as pl
from jax.experimental.pallas import tpu as pltpu


def _gelu_exact(x):
    # Exact (erf-based) GELU.  erf via Abramowitz & Stegun 7.1.26 (|err| <= 1.5e-7,
    # i.e. float32-accurate), built only from exp / mul / div which always lower.
    # TODO(synk): switch to jax.lax.erf once an erf lowering is guaranteed in Mosaic.
    inv_sqrt2 = 0.7071067811865476
    z = x * inv_sqrt2
    a1, a2, a3, a4, a5 = (0.254829592, -0.284496736, 1.421413741,
                          -1.453152027, 1.061405429)
    p = 0.3275911
    az = jnp.abs(z)
    t = 1.0 / (1.0 + p * az)
    poly = ((((a5 * t + a4) * t + a3) * t + a2) * t + a1) * t
    erf_abs = 1.0 - poly * jnp.exp(-az * az)
    erf_z = jnp.where(z >= 0.0, erf_abs, -erf_abs)
    return 0.5 * x * (1.0 + erf_z)


# ---------------------------------------------------------------------------
# Fused decoder kernel: embedding (d==0) + one CABlock per depth step
# ---------------------------------------------------------------------------
def _decoder_kernel(
    inp_ref, pos_ref, ctx_ref,
    emb_w_ref, emb_b_ref,
    ln1_g_ref, ln1_b_ref, qkv_w_ref, sa_ow_ref, sa_ob_ref,
    ln2_g_ref, ln2_b_ref, caq_w_ref, cakv_w_ref, ca_ow_ref, ca_ob_ref,
    ln3_g_ref, ln3_b_ref, fc1_w_ref, fc1_b_ref, fc2_w_ref, fc2_b_ref,
    o_ref,
    *, heads, dim_head, eps,
):
    inner = heads * dim_head
    scale = dim_head ** (-0.5)
    bf16 = jnp.bfloat16
    d = pl.program_id(1)

    def layernorm(v, g_ref, b_ref):
        mu = jnp.mean(v, axis=-1, keepdims=True)
        c = v - mu
        var = jnp.mean(c * c, axis=-1, keepdims=True)
        return c * jax.lax.rsqrt(var + eps) * g_ref[...] + b_ref[...]

    def mm(a_f32, w_ref):
        # bf16 MXU operands, f32 accumulation.
        return jnp.dot(a_f32.astype(bf16), w_ref[...],
                       preferred_element_type=jnp.float32)

    def mha(q, k, v):
        # q: (Nq, inner), k/v: (Nk, inner) f32.  Per-head attention kept in-register.
        q = q * scale                                       # scale folded into q
        outs = []
        for hh in range(heads):
            sl = slice(hh * dim_head, (hh + 1) * dim_head)
            qh = q[:, sl].astype(bf16)
            kh = k[:, sl].astype(bf16)
            vh = v[:, sl].astype(bf16)
            s = jax.lax.dot_general(                        # q @ k^T, no transpose
                qh, kh, (((1,), (1,)), ((), ())),
                preferred_element_type=jnp.float32)         # (Nq, Nk) f32
            s = s - jnp.max(s, axis=-1, keepdims=True)
            p = jnp.exp(s)
            p = p * pl.reciprocal(jnp.sum(p, axis=-1, keepdims=True), approx=True)
            outs.append(jnp.dot(p.astype(bf16), vh,
                                preferred_element_type=jnp.float32))
        return jnp.concatenate(outs, axis=-1) if heads > 1 else outs[0]

    # ---- token embedding + positional embedding (first depth step only) ----
    @pl.when(d == 0)
    def _():
        e = jnp.dot(inp_ref[...].astype(bf16), emb_w_ref[...],
                    preferred_element_type=jnp.float32)
        o_ref[...] = e + emb_b_ref[...] + pos_ref[...]

    x = o_ref[...]          # (N, dim) f32, carried in VMEM across the depth axis
    ctx = ctx_ref[...]      # (M, Cd)  f32

    # ---- self-attention: x = SA(LN1(x)) + x --------------------------------
    y = layernorm(x, ln1_g_ref, ln1_b_ref)
    qkv = mm(y, qkv_w_ref)                                   # bias=False
    o = mha(qkv[:, :inner], qkv[:, inner:2 * inner], qkv[:, 2 * inner:])
    x = x + mm(o, sa_ow_ref) + sa_ob_ref[...]                # fused residual

    # ---- cross-attention: x = CA(LN2(x), context) + x ----------------------
    y = layernorm(x, ln2_g_ref, ln2_b_ref)
    q = mm(y, caq_w_ref)                                     # bias=False
    kv = mm(ctx, cakv_w_ref)                                 # bias=False
    o = mha(q, kv[:, :inner], kv[:, inner:])
    x = x + mm(o, ca_ow_ref) + ca_ob_ref[...]                # fused residual

    # ---- MLP: x = fc2(GELU(fc1(LN3(x)))) + x --------------------------------
    y = layernorm(x, ln3_g_ref, ln3_b_ref)
    ff = mm(y, fc1_w_ref) + fc1_b_ref[...]
    ff = _gelu_exact(ff)                                     # exact erf GELU, fused
    x = x + mm(ff, fc2_w_ref) + fc2_b_ref[...]               # fused residual

    o_ref[...] = x


# ---------------------------------------------------------------------------
# Wrapper (eval mode: DropTokenDropout / nn.Dropout are identity)
# ---------------------------------------------------------------------------
def transformer_decoder_forward(params, inp, context, *, heads, dim_head, eps=1e-5):
    B, N, Td = inp.shape
    _, M, Cd = context.shape
    D = params["emb_w"].shape[1]
    depth = params["ln1_g"].shape[0]
    pos = params["pos"][:, :N]                    # static slice at trace time

    def rep(shape):  # whole-grid-resident block (embedding weights / bias)
        return pl.BlockSpec(shape, lambda b, d, _s=len(shape): (0,) * _s)

    def per_depth(shape):  # stacked per-block params, indexed by the depth axis
        return pl.BlockSpec((None,) + tuple(shape[1:]), lambda b, d: (d, 0, 0))

    kernel = functools.partial(_decoder_kernel, heads=heads, dim_head=dim_head, eps=eps)

    return pl.pallas_call(
        kernel,
        out_shape=jax.ShapeDtypeStruct((B, N, D), jnp.float32),
        grid=(B, depth),
        in_specs=[
            pl.BlockSpec((None, N, Td), lambda b, d: (b, 0, 0)),   # inp
            pl.BlockSpec((None, N, D), lambda b, d: (0, 0, 0)),    # pos embedding
            pl.BlockSpec((None, M, Cd), lambda b, d: (b, 0, 0)),   # context
            rep((Td, D)), rep((1, D)),                             # emb W / b
            per_depth(params["ln1_g"].shape), per_depth(params["ln1_b"].shape),
            per_depth(params["sa_qkv_w"].shape),
            per_depth(params["sa_out_w"].shape), per_depth(params["sa_out_b"].shape),
            per_depth(params["ln2_g"].shape), per_depth(params["ln2_b"].shape),
            per_depth(params["ca_q_w"].shape), per_depth(params["ca_kv_w"].shape),
            per_depth(params["ca_out_w"].shape), per_depth(params["ca_out_b"].shape),
            per_depth(params["ln3_g"].shape), per_depth(params["ln3_b"].shape),
            per_depth(params["fc1_w"].shape), per_depth(params["fc1_b"].shape),
            per_depth(params["fc2_w"].shape), per_depth(params["fc2_b"].shape),
        ],
        out_specs=pl.BlockSpec((None, N, D), lambda b, d: (b, 0, 0)),
        compiler_params=pltpu.CompilerParams(
            dimension_semantics=("parallel", "arbitrary")),
    )(
        inp, pos, context,
        params["emb_w"], params["emb_b"],
        params["ln1_g"], params["ln1_b"], params["sa_qkv_w"],
        params["sa_out_w"], params["sa_out_b"],
        params["ln2_g"], params["ln2_b"], params["ca_q_w"], params["ca_kv_w"],
        params["ca_out_w"], params["ca_out_b"],
        params["ln3_g"], params["ln3_b"], params["fc1_w"], params["fc1_b"],
        params["fc2_w"], params["fc2_b"],
    )


# ---------------------------------------------------------------------------
# Deterministic parameter init (matmul weights stored bf16, rest f32;
# per-block params stacked along a leading depth axis)
# ---------------------------------------------------------------------------
def init_params(key, *, num_tokens, token_dim, dim, depth, heads, dim_head,
                mlp_dim, context_dim):
    inner = heads * dim_head
    ks = jax.random.split(key, 2 + depth)

    def wgt(k, shape, s=0.02):
        return (s * jax.random.normal(k, shape, jnp.float32)).astype(jnp.bfloat16)

    params = {
        "emb_w": wgt(ks[0], (token_dim, dim)),
        "emb_b": jnp.zeros((1, dim), jnp.float32),
        "pos": jax.random.normal(ks[1], (1, num_tokens, dim), jnp.float32),
    }

    blocks = []
    for dd in range(depth):
        bk = jax.random.split(ks[2 + dd], 7)
        blocks.append(dict(
            ln1_g=jnp.ones((1, dim), jnp.float32),
            ln1_b=jnp.zeros((1, dim), jnp.float32),
            sa_qkv_w=wgt(bk[0], (dim, 3 * inner)),            # bias=False
            sa_out_w=wgt(bk[1], (inner, dim)),
            sa_out_b=jnp.zeros((1, dim), jnp.float32),
            ln2_g=jnp.ones((1, dim), jnp.float32),
            ln2_b=jnp.zeros((1, dim), jnp.float32),
            ca_q_w=wgt(bk[2], (dim, inner)),                  # bias=False
            ca_kv_w=wgt(bk[3], (context_dim, 2 * inner)),     # bias=False
            ca_out_w=wgt(bk[4], (inner, dim)),
            ca_out_b=jnp.zeros((1, dim), jnp.float32),
            ln3_g=jnp.ones((1, dim), jnp.float32),
            ln3_b=jnp.zeros((1, dim), jnp.float32),
            fc1_w=wgt(bk[5], (dim, mlp_dim)),
            fc1_b=jnp.zeros((1, mlp_dim), jnp.float32),
            fc2_w=wgt(bk[6], (mlp_dim, dim)),
            fc2_b=jnp.zeros((1, dim), jnp.float32),
        ))
    for name in blocks[0]:
        params[name] = jnp.stack([blk[name] for blk in blocks], axis=0)
    return params


# ---------------------------------------------------------------------------
if __name__ == "__main__":
    # small config consistent with the module's __init__
    B = 2
    num_tokens = 8      # seq length n
    token_dim = 16
    dim = 32
    depth = 2
    heads = 2
    dim_head = 8
    mlp_dim = 64
    context_dim = 24
    ctx_len = 6

    key = jax.random.PRNGKey(0)
    k_inp, k_ctx, k_par = jax.random.split(key, 3)

    inp = jax.random.normal(k_inp, (B, num_tokens, token_dim), jnp.float32)
    context = jax.random.normal(k_ctx, (B, ctx_len, context_dim), jnp.float32)

    params = init_params(
        k_par, num_tokens=num_tokens, token_dim=token_dim, dim=dim, depth=depth,
        heads=heads, dim_head=dim_head, mlp_dim=mlp_dim, context_dim=context_dim,
    )

    fwd = jax.jit(
        functools.partial(transformer_decoder_forward, heads=heads, dim_head=dim_head)
    )
    out = fwd(params, inp, context)
    jax.block_until_ready(out)

    assert out.shape == (B, num_tokens, dim)
    assert bool(jnp.all(jnp.isfinite(out)))
    print("KERNEL_OK")
</pallas_src>

<mosaic_0001>
module attributes {stable_mosaic.version = 11 : i64} {
  func.func @_decoder_kernel(%arg0: i32, %arg1: i32, %arg2: memref<1x8x16xf32, #tpu.memory_space<vmem>>, %arg3: memref<1x8x32xf32, #tpu.memory_space<vmem>>, %arg4: memref<1x6x24xf32, #tpu.memory_space<vmem>>, %arg5: memref<16x32xbf16, #tpu.memory_space<vmem>>, %arg6: memref<1x32xf32, #tpu.memory_space<vmem>>, %arg7: memref<1x1x32xf32, #tpu.memory_space<vmem>>, %arg8: memref<1x1x32xf32, #tpu.memory_space<vmem>>, %arg9: memref<1x32x48xbf16, #tpu.memory_space<vmem>>, %arg10: memref<1x16x32xbf16, #tpu.memory_space<vmem>>, %arg11: memref<1x1x32xf32, #tpu.memory_space<vmem>>, %arg12: memref<1x1x32xf32, #tpu.memory_space<vmem>>, %arg13: memref<1x1x32xf32, #tpu.memory_space<vmem>>, %arg14: memref<1x32x16xbf16, #tpu.memory_space<vmem>>, %arg15: memref<1x24x32xbf16, #tpu.memory_space<vmem>>, %arg16: memref<1x16x32xbf16, #tpu.memory_space<vmem>>, %arg17: memref<1x1x32xf32, #tpu.memory_space<vmem>>, %arg18: memref<1x1x32xf32, #tpu.memory_space<vmem>>, %arg19: memref<1x1x32xf32, #tpu.memory_space<vmem>>, %arg20: memref<1x32x64xbf16, #tpu.memory_space<vmem>>, %arg21: memref<1x1x64xf32, #tpu.memory_space<vmem>>, %arg22: memref<1x64x32xbf16, #tpu.memory_space<vmem>>, %arg23: memref<1x1x32xf32, #tpu.memory_space<vmem>>, %arg24: memref<1x8x32xf32, #tpu.memory_space<vmem>>) attributes {dimension_semantics = [#tpu.dimension_semantics<parallel>, #tpu.dimension_semantics<arbitrary>], iteration_bounds = array<i64: 2, 2>, scalar_prefetch = 0 : i64, scratch_operands = 0 : i64, tpu.core_type = #tpu.core_type<tc>, window_params = [{transform_indices = @transform_0, window_bounds = array<i64: 1, 8, 16>}, {pipeline_mode = #tpu.pipeline_mode<synchronous>, transform_indices = @transform_1, window_bounds = array<i64: 1, 8, 32>}, {transform_indices = @transform_2, window_bounds = array<i64: 1, 6, 24>}, {pipeline_mode = #tpu.pipeline_mode<synchronous>, transform_indices = @transform_3, window_bounds = array<i64: 16, 32>}, {pipeline_mode = #tpu.pipeline_mode<synchronous>, transform_indices = @transform_4, window_bounds = array<i64: 1, 32>}, {transform_indices = @transform_5, window_bounds = array<i64: 1, 1, 32>}, {transform_indices = @transform_6, window_bounds = array<i64: 1, 1, 32>}, {transform_indices = @transform_7, window_bounds = array<i64: 1, 32, 48>}, {transform_indices = @transform_8, window_bounds = array<i64: 1, 16, 32>}, {transform_indices = @transform_9, window_bounds = array<i64: 1, 1, 32>}, {transform_indices = @transform_10, window_bounds = array<i64: 1, 1, 32>}, {transform_indices = @transform_11, window_bounds = array<i64: 1, 1, 32>}, {transform_indices = @transform_12, window_bounds = array<i64: 1, 32, 16>}, {transform_indices = @transform_13, window_bounds = array<i64: 1, 24, 32>}, {transform_indices = @transform_14, window_bounds = array<i64: 1, 16, 32>}, {transform_indices = @transform_15, window_bounds = array<i64: 1, 1, 32>}, {transform_indices = @transform_16, window_bounds = array<i64: 1, 1, 32>}, {transform_indices = @transform_17, window_bounds = array<i64: 1, 1, 32>}, {transform_indices = @transform_18, window_bounds = array<i64: 1, 32, 64>}, {transform_indices = @transform_19, window_bounds = array<i64: 1, 1, 64>}, {transform_indices = @transform_20, window_bounds = array<i64: 1, 64, 32>}, {transform_indices = @transform_21, window_bounds = array<i64: 1, 1, 32>}, {transform_indices = @transform_22, window_bounds = array<i64: 1, 8, 32>}]} {
    %c0_i32 = arith.constant 0 : i32
    %0 = arith.cmpi eq, %arg1, %c0_i32 : i32
    %1 = arith.extui %0 : i1 to i32
    %c0_i32_0 = arith.constant 0 : i32
    %2 = arith.cmpi ne, %1, %c0_i32_0 : i32
    scf.if %2 {
      %c0_114 = arith.constant 0 : index
      %c0_115 = arith.constant 0 : index
      %c0_116 = arith.constant 0 : index
      %256 = vector.load %arg2[%c0_114, %c0_115, %c0_116] : memref<1x8x16xf32, #tpu.memory_space<vmem>>, vector<1x8x16xf32>
      %257 = vector.shape_cast %256 : vector<1x8x16xf32> to vector<8x16xf32>
      %258 = arith.truncf %257 : vector<8x16xf32> to vector<8x16xbf16>
      %c0_117 = arith.constant 0 : index
      %c0_118 = arith.constant 0 : index
      %259 = vector.load %arg5[%c0_117, %c0_118] : memref<16x32xbf16, #tpu.memory_space<vmem>>, vector<16x32xbf16>
      %cst_119 = arith.constant dense<0.000000e+00> : vector<8x32xf32>
      %260 = tpu.matmul %258, %259, %cst_119 {dimension_numbers = #tpu.dot_dimension_numbers<[1], [0], [0], [1], [0, 0, 1, 1], [], []>} : vector<8x16xbf16>, vector<16x32xbf16>, vector<8x32xf32> -> vector<8x32xf32>
      %c0_120 = arith.constant 0 : index
      %c0_121 = arith.constant 0 : index
      %261 = vector.load %arg6[%c0_120, %c0_121] : memref<1x32xf32, #tpu.memory_space<vmem>>, vector<1x32xf32>
      %262 = vector.broadcast %261 : vector<1x32xf32> to vector<8x32xf32>
      %263 = arith.addf %260, %262 : vector<8x32xf32>
      %c0_122 = arith.constant 0 : index
      %c0_123 = arith.constant 0 : index
      %c0_124 = arith.constant 0 : index
      %264 = vector.load %arg3[%c0_122, %c0_123, %c0_124] : memref<1x8x32xf32, #tpu.memory_space<vmem>>, vector<1x8x32xf32>
      %265 = vector.shape_cast %264 : vector<1x8x32xf32> to vector<8x32xf32>
      %266 = arith.addf %263, %265 : vector<8x32xf32>
      %c0_125 = arith.constant 0 : index
      %c0_126 = arith.constant 0 : index
      %c0_127 = arith.constant 0 : index
      %267 = vector.load %arg24[%c0_125, %c0_126, %c0_127] : memref<1x8x32xf32, #tpu.memory_space<vmem>>, vector<1x8x32xf32>
      %268 = vector.shape_cast %267 : vector<1x8x32xf32> to vector<8x32xf32>
      %269 = vector.shape_cast %266 : vector<8x32xf32> to vector<1x8x32xf32>
      tpu.vector_store %arg24[%c0_125, %c0_126, %c0_127], %269 {strides = array<i32>} : memref<1x8x32xf32, #tpu.memory_space<vmem>>, vector<1x8x32xf32>,
    } else {
    }
    %c0 = arith.constant 0 : index
    %c0_1 = arith.constant 0 : index
    %c0_2 = arith.constant 0 : index
    %3 = vector.load %arg24[%c0, %c0_1, %c0_2] : memref<1x8x32xf32, #tpu.memory_space<vmem>>, vector<1x8x32xf32>
    %4 = vector.shape_cast %3 : vector<1x8x32xf32> to vector<8x32xf32>
    %c0_3 = arith.constant 0 : index
    %c0_4 = arith.constant 0 : index
    %c0_5 = arith.constant 0 : index
    %5 = vector.load %arg4[%c0_3, %c0_4, %c0_5] : memref<1x6x24xf32, #tpu.memory_space<vmem>>, vector<1x6x24xf32>
    %6 = vector.shape_cast %5 : vector<1x6x24xf32> to vector<6x24xf32>
    %cst = arith.constant dense<0.000000e+00> : vector<8xf32>
    %7 = vector.multi_reduction <add>, %4, %cst [1] : vector<8x32xf32> to vector<8xf32>
    %8 = vector.shape_cast %7 : vector<8xf32> to vector<8x1xf32>
    %cst_6 = arith.constant 3.200000e+01 : f32
    %9 = vector.broadcast %cst_6 : f32 to vector<8x1xf32>
    %10 = arith.divf %8, %9 : vector<8x1xf32>
    %11 = vector.broadcast %10 : vector<8x1xf32> to vector<8x32xf32>
    %12 = arith.subf %4, %11 : vector<8x32xf32>
    %13 = arith.mulf %12, %12 : vector<8x32xf32>
    %cst_7 = arith.constant dense<0.000000e+00> : vector<8xf32>
    %14 = vector.multi_reduction <add>, %13, %cst_7 [1] : vector<8x32xf32> to vector<8xf32>
    %15 = vector.shape_cast %14 : vector<8xf32> to vector<8x1xf32>
    %cst_8 = arith.constant 3.200000e+01 : f32
    %16 = vector.broadcast %cst_8 : f32 to vector<8x1xf32>
    %17 = arith.divf %15, %16 : vector<8x1xf32>
    %cst_9 = arith.constant 9.99999974E-6 : f32
    %18 = vector.broadcast %cst_9 : f32 to vector<8x1xf32>
    %19 = arith.addf %17, %18 : vector<8x1xf32>
    %20 = math.rsqrt %19 : vector<8x1xf32>
    %21 = vector.broadcast %20 : vector<8x1xf32> to vector<8x32xf32>
    %22 = arith.mulf %12, %21 : vector<8x32xf32>
    %c0_10 = arith.constant 0 : index
    %c0_11 = arith.constant 0 : index
    %c0_12 = arith.constant 0 : index
    %23 = vector.load %arg7[%c0_10, %c0_11, %c0_12] : memref<1x1x32xf32, #tpu.memory_space<vmem>>, vector<1x1x32xf32>
    %24 = vector.shape_cast %23 : vector<1x1x32xf32> to vector<1x32xf32>
    %25 = vector.broadcast %24 : vector<1x32xf32> to vector<8x32xf32>
    %26 = arith.mulf %22, %25 : vector<8x32xf32>
    %c0_13 = arith.constant 0 : index
    %c0_14 = arith.constant 0 : index
    %c0_15 = arith.constant 0 : index
    %27 = vector.load %arg8[%c0_13, %c0_14, %c0_15] : memref<1x1x32xf32, #tpu.memory_space<vmem>>, vector<1x1x32xf32>
    %28 = vector.shape_cast %27 : vector<1x1x32xf32> to vector<1x32xf32>
    %29 = vector.broadcast %28 : vector<1x32xf32> to vector<8x32xf32>
    %30 = arith.addf %26, %29 : vector<8x32xf32>
    %31 = arith.truncf %30 : vector<8x32xf32> to vector<8x32xbf16>
    %c0_16 = arith.constant 0 : index
    %c0_17 = arith.constant 0 : index
    %c0_18 = arith.constant 0 : index
    %32 = vector.load %arg9[%c0_16, %c0_17, %c0_18] : memref<1x32x48xbf16, #tpu.memory_space<vmem>>, vector<1x32x48xbf16>
    %33 = vector.shape_cast %32 : vector<1x32x48xbf16> to vector<32x48xbf16>
    %cst_19 = arith.constant dense<0.000000e+00> : vector<8x48xf32>
    %34 = tpu.matmul %31, %33, %cst_19 {dimension_numbers = #tpu.dot_dimension_numbers<[1], [0], [0], [1], [0, 0, 1, 1], [], []>} : vector<8x32xbf16>, vector<32x48xbf16>, vector<8x48xf32> -> vector<8x48xf32>
    %35 = vector.extract_strided_slice %34 {offsets = [0, 0], sizes = [8, 16], strides = [1, 1]} : vector<8x48xf32> to vector<8x16xf32>
    %36 = vector.extract_strided_slice %34 {offsets = [0, 16], sizes = [8, 16], strides = [1, 1]} : vector<8x48xf32> to vector<8x16xf32>
    %37 = vector.extract_strided_slice %34 {offsets = [0, 32], sizes = [8, 16], strides = [1, 1]} : vector<8x48xf32> to vector<8x16xf32>
    %cst_20 = arith.constant 0.353553385 : f32
    %38 = vector.broadcast %cst_20 : f32 to vector<8x16xf32>
    %39 = arith.mulf %35, %38 : vector<8x16xf32>
    %40 = vector.extract_strided_slice %39 {offsets = [0, 0], sizes = [8, 8], strides = [1, 1]} : vector<8x16xf32> to vector<8x8xf32>
    %41 = arith.truncf %40 : vector<8x8xf32> to vector<8x8xbf16>
    %42 = vector.extract_strided_slice %36 {offsets = [0, 0], sizes = [8, 8], strides = [1, 1]} : vector<8x16xf32> to vector<8x8xf32>
    %43 = arith.truncf %42 : vector<8x8xf32> to vector<8x8xbf16>
    %44 = vector.extract_strided_slice %37 {offsets = [0, 0], sizes = [8, 8], strides = [1, 1]} : vector<8x16xf32> to vector<8x8xf32>
    %45 = arith.truncf %44 : vector<8x8xf32> to vector<8x8xbf16>
    %cst_21 = arith.constant dense<0.000000e+00> : vector<8x8xf32>
    %46 = tpu.matmul %41, %43, %cst_21 {dimension_numbers = #tpu.dot_dimension_numbers<[1], [1], [0], [0], [0, 0, 1, 0], [], []>} : vector<8x8xbf16>, vector<8x8xbf16>, vector<8x8xf32> -> vector<8x8xf32>
    %cst_22 = arith.constant dense<0xFF800000> : vector<8xf32>
    %47 = vector.multi_reduction <maximumf>, %46, %cst_22 [1] : vector<8x8xf32> to vector<8xf32>
    %48 = vector.shape_cast %47 : vector<8xf32> to vector<8x1xf32>
    %49 = vector.broadcast %48 : vector<8x1xf32> to vector<8x8xf32>
    %50 = arith.subf %46, %49 : vector<8x8xf32>
    %51 = math.exp %50 : vector<8x8xf32>
    %cst_23 = arith.constant dense<0.000000e+00> : vector<8xf32>
    %52 = vector.multi_reduction <add>, %51, %cst_23 [1] : vector<8x8xf32> to vector<8xf32>
    %53 = vector.shape_cast %52 : vector<8xf32> to vector<8x1xf32>
    %54 = tpu.reciprocal %53 {approx = true} : vector<8x1xf32> -> vector<8x1xf32>
    %55 = vector.broadcast %54 : vector<8x1xf32> to vector<8x8xf32>
    %56 = arith.mulf %51, %55 : vector<8x8xf32>
    %57 = arith.truncf %56 : vector<8x8xf32> to vector<8x8xbf16>
    %cst_24 = arith.constant dense<0.000000e+00> : vector<8x8xf32>
    %58 = tpu.matmul %57, %45, %cst_24 {dimension_numbers = #tpu.dot_dimension_numbers<[1], [0], [0], [1], [0, 0, 1, 1], [], []>} : vector<8x8xbf16>, vector<8x8xbf16>, vector<8x8xf32> -> vector<8x8xf32>
    %59 = vector.extract_strided_slice %39 {offsets = [0, 8], sizes = [8, 8], strides = [1, 1]} : vector<8x16xf32> to vector<8x8xf32>
    %60 = arith.truncf %59 : vector<8x8xf32> to vector<8x8xbf16>
    %61 = vector.extract_strided_slice %36 {offsets = [0, 8], sizes = [8, 8], strides = [1, 1]} : vector<8x16xf32> to vector<8x8xf32>
    %62 = arith.truncf %61 : vector<8x8xf32> to vector<8x8xbf16>
    %63 = vector.extract_strided_slice %37 {offsets = [0, 8], sizes = [8, 8], strides = [1, 1]} : vector<8x16xf32> to vector<8x8xf32>
    %64 = arith.truncf %63 : vector<8x8xf32> to vector<8x8xbf16>
    %cst_25 = arith.constant dense<0.000000e+00> : vector<8x8xf32>
    %65 = tpu.matmul %60, %62, %cst_25 {dimension_numbers = #tpu.dot_dimension_numbers<[1], [1], [0], [0], [0, 0, 1, 0], [], []>} : vector<8x8xbf16>, vector<8x8xbf16>, vector<8x8xf32> -> vector<8x8xf32>
    %cst_26 = arith.constant dense<0xFF800000> : vector<8xf32>
    %66 = vector.multi_reduction <maximumf>, %65, %cst_26 [1] : vector<8x8xf32> to vector<8xf32>
    %67 = vector.shape_cast %66 : vector<8xf32> to vector<8x1xf32>
    %68 = vector.broadcast %67 : vector<8x1xf32> to vector<8x8xf32>
    %69 = arith.subf %65, %68 : vector<8x8xf32>
    %70 = math.exp %69 : vector<8x8xf32>
    %cst_27 = arith.constant dense<0.000000e+00> : vector<8xf32>
    %71 = vector.multi_reduction <add>, %70, %cst_27 [1] : vector<8x8xf32> to vector<8xf32>
    %72 = vector.shape_cast %71 : vector<8xf32> to vector<8x1xf32>
    %73 = tpu.reciprocal %72 {approx = true} : vector<8x1xf32> -> vector<8x1xf32>
    %74 = vector.broadcast %73 : vector<8x1xf32> to vector<8x8xf32>
    %75 = arith.mulf %70, %74 : vector<8x8xf32>
    %76 = arith.truncf %75 : vector<8x8xf32> to vector<8x8xbf16>
    %cst_28 = arith.constant dense<0.000000e+00> : vector<8x8xf32>
    %77 = tpu.matmul %76, %64, %cst_28 {dimension_numbers = #tpu.dot_dimension_numbers<[1], [0], [0], [1], [0, 0, 1, 1], [], []>} : vector<8x8xbf16>, vector<8x8xbf16>, vector<8x8xf32> -> vector<8x8xf32>
    %78 = tpu.concatenate %58, %77 in 1 : vector<8x8xf32>, vector<8x8xf32> -> vector<8x16xf32>
    %79 = arith.truncf %78 : vector<8x16xf32> to vector<8x16xbf16>
    %c0_29 = arith.constant 0 : index
    %c0_30 = arith.constant 0 : index
    %c0_31 = arith.constant 0 : index
    %80 = vector.load %arg10[%c0_29, %c0_30, %c0_31] : memref<1x16x32xbf16, #tpu.memory_space<vmem>>, vector<1x16x32xbf16>
    %81 = vector.shape_cast %80 : vector<1x16x32xbf16> to vector<16x32xbf16>
    %cst_32 = arith.constant dense<0.000000e+00> : vector<8x32xf32>
    %82 = tpu.matmul %79, %81, %cst_32 {dimension_numbers = #tpu.dot_dimension_numbers<[1], [0], [0], [1], [0, 0, 1, 1], [], []>} : vector<8x16xbf16>, vector<16x32xbf16>, vector<8x32xf32> -> vector<8x32xf32>
    %83 = arith.addf %4, %82 : vector<8x32xf32>
    %c0_33 = arith.constant 0 : index
    %c0_34 = arith.constant 0 : index
    %c0_35 = arith.constant 0 : index
    %84 = vector.load %arg11[%c0_33, %c0_34, %c0_35] : memref<1x1x32xf32, #tpu.memory_space<vmem>>, vector<1x1x32xf32>
    %85 = vector.shape_cast %84 : vector<1x1x32xf32> to vector<1x32xf32>
    %86 = vector.broadcast %85 : vector<1x32xf32> to vector<8x32xf32>
    %87 = arith.addf %83, %86 : vector<8x32xf32>
    %cst_36 = arith.constant dense<0.000000e+00> : vector<8xf32>
    %88 = vector.multi_reduction <add>, %87, %cst_36 [1] : vector<8x32xf32> to vector<8xf32>
    %89 = vector.shape_cast %88 : vector<8xf32> to vector<8x1xf32>
    %cst_37 = arith.constant 3.200000e+01 : f32
    %90 = vector.broadcast %cst_37 : f32 to vector<8x1xf32>
    %91 = arith.divf %89, %90 : vector<8x1xf32>
    %92 = vector.broadcast %91 : vector<8x1xf32> to vector<8x32xf32>
    %93 = arith.subf %87, %92 : vector<8x32xf32>
    %94 = arith.mulf %93, %93 : vector<8x32xf32>
    %cst_38 = arith.constant dense<0.000000e+00> : vector<8xf32>
    %95 = vector.multi_reduction <add>, %94, %cst_38 [1] : vector<8x32xf32> to vector<8xf32>
    %96 = vector.shape_cast %95 : vector<8xf32> to vector<8x1xf32>
    %cst_39 = arith.constant 3.200000e+01 : f32
    %97 = vector.broadcast %cst_39 : f32 to vector<8x1xf32>
    %98 = arith.divf %96, %97 : vector<8x1xf32>
    %cst_40 = arith.constant 9.99999974E-6 : f32
    %99 = vector.broadcast %cst_40 : f32 to vector<8x1xf32>
    %100 = arith.addf %98, %99 : vector<8x1xf32>
    %101 = math.rsqrt %100 : vector<8x1xf32>
    %102 = vector.broadcast %101 : vector<8x1xf32> to vector<8x32xf32>
    %103 = arith.mulf %93, %102 : vector<8x32xf32>
    %c0_41 = arith.constant 0 : index
    %c0_42 = arith.constant 0 : index
    %c0_43 = arith.constant 0 : index
    %104 = vector.load %arg12[%c0_41, %c0_42, %c0_43] : memref<1x1x32xf32, #tpu.memory_space<vmem>>, vector<1x1x32xf32>
    %105 = vector.shape_cast %104 : vector<1x1x32xf32> to vector<1x32xf32>
    %106 = vector.broadcast %105 : vector<1x32xf32> to vector<8x32xf32>
    %107 = arith.mulf %103, %106 : vector<8x32xf32>
    %c0_44 = arith.constant 0 : index
    %c0_45 = arith.constant 0 : index
    %c0_46 = arith.constant 0 : index
    %108 = vector.load %arg13[%c0_44, %c0_45, %c0_46] : memref<1x1x32xf32, #tpu.memory_space<vmem>>, vector<1x1x32xf32>
    %109 = vector.shape_cast %108 : vector<1x1x32xf32> to vector<1x32xf32>
    %110 = vector.broadcast %109 : vector<1x32xf32> to vector<8x32xf32>
    %111 = arith.addf %107, %110 : vector<8x32xf32>
    %112 = arith.truncf %111 : vector<8x32xf32> to vector<8x32xbf16>
    %c0_47 = arith.constant 0 : index
    %c0_48 = arith.constant 0 : index
    %c0_49 = arith.constant 0 : index
    %113 = vector.load %arg14[%c0_47, %c0_48, %c0_49] : memref<1x32x16xbf16, #tpu.memory_space<vmem>>, vector<1x32x16xbf16>
    %114 = vector.shape_cast %113 : vector<1x32x16xbf16> to vector<32x16xbf16>
    %cst_50 = arith.constant dense<0.000000e+00> : vector<8x16xf32>
    %115 = tpu.matmul %112, %114, %cst_50 {dimension_numbers = #tpu.dot_dimension_numbers<[1], [0], [0], [1], [0, 0, 1, 1], [], []>} : vector<8x32xbf16>, vector<32x16xbf16>, vector<8x16xf32> -> vector<8x16xf32>
    %116 = arith.truncf %6 : vector<6x24xf32> to vector<6x24xbf16>
    %c0_51 = arith.constant 0 : index
    %c0_52 = arith.constant 0 : index
    %c0_53 = arith.constant 0 : index
    %117 = vector.load %arg15[%c0_51, %c0_52, %c0_53] : memref<1x24x32xbf16, #tpu.memory_space<vmem>>, vector<1x24x32xbf16>
    %118 = vector.shape_cast %117 : vector<1x24x32xbf16> to vector<24x32xbf16>
    %cst_54 = arith.constant dense<0.000000e+00> : vector<6x32xf32>
    %119 = tpu.matmul %116, %118, %cst_54 {dimension_numbers = #tpu.dot_dimension_numbers<[1], [0], [0], [1], [0, 0, 1, 1], [], []>} : vector<6x24xbf16>, vector<24x32xbf16>, vector<6x32xf32> -> vector<6x32xf32>
    %120 = vector.extract_strided_slice %119 {offsets = [0, 0], sizes = [6, 16], strides = [1, 1]} : vector<6x32xf32> to vector<6x16xf32>
    %121 = vector.extract_strided_slice %119 {offsets = [0, 16], sizes = [6, 16], strides = [1, 1]} : vector<6x32xf32> to vector<6x16xf32>
    %cst_55 = arith.constant 0.353553385 : f32
    %122 = vector.broadcast %cst_55 : f32 to vector<8x16xf32>
    %123 = arith.mulf %115, %122 : vector<8x16xf32>
    %124 = vector.extract_strided_slice %123 {offsets = [0, 0], sizes = [8, 8], strides = [1, 1]} : vector<8x16xf32> to vector<8x8xf32>
    %125 = arith.truncf %124 : vector<8x8xf32> to vector<8x8xbf16>
    %126 = vector.extract_strided_slice %120 {offsets = [0, 0], sizes = [6, 8], strides = [1, 1]} : vector<6x16xf32> to vector<6x8xf32>
    %127 = arith.truncf %126 : vector<6x8xf32> to vector<6x8xbf16>
    %128 = vector.extract_strided_slice %121 {offsets = [0, 0], sizes = [6, 8], strides = [1, 1]} : vector<6x16xf32> to vector<6x8xf32>
    %129 = arith.truncf %128 : vector<6x8xf32> to vector<6x8xbf16>
    %cst_56 = arith.constant dense<0.000000e+00> : vector<8x6xf32>
    %130 = tpu.matmul %125, %127, %cst_56 {dimension_numbers = #tpu.dot_dimension_numbers<[1], [1], [0], [0], [0, 0, 1, 0], [], []>} : vector<8x8xbf16>, vector<6x8xbf16>, vector<8x6xf32> -> vector<8x6xf32>
    %cst_57 = arith.constant dense<0xFF800000> : vector<8xf32>
    %131 = vector.multi_reduction <maximumf>, %130, %cst_57 [1] : vector<8x6xf32> to vector<8xf32>
    %132 = vector.shape_cast %131 : vector<8xf32> to vector<8x1xf32>
    %133 = vector.broadcast %132 : vector<8x1xf32> to vector<8x6xf32>
    %134 = arith.subf %130, %133 : vector<8x6xf32>
    %135 = math.exp %134 : vector<8x6xf32>
    %cst_58 = arith.constant dense<0.000000e+00> : vector<8xf32>
    %136 = vector.multi_reduction <add>, %135, %cst_58 [1] : vector<8x6xf32> to vector<8xf32>
    %137 = vector.shape_cast %136 : vector<8xf32> to vector<8x1xf32>
    %138 = tpu.reciprocal %137 {approx = true} : vector<8x1xf32> -> vector<8x1xf32>
    %139 = vector.broadcast %138 : vector<8x1xf32> to vector<8x6xf32>
    %140 = arith.mulf %135, %139 : vector<8x6xf32>
    %141 = arith.truncf %140 : vector<8x6xf32> to vector<8x6xbf16>
    %cst_59 = arith.constant dense<0.000000e+00> : vector<8x8xf32>
    %142 = tpu.matmul %141, %129, %cst_59 {dimension_numbers = #tpu.dot_dimension_numbers<[1], [0], [0], [1], [0, 0, 1, 1], [], []>} : vector<8x6xbf16>, vector<6x8xbf16>, vector<8x8xf32> -> vector<8x8xf32>
    %143 = vector.extract_strided_slice %123 {offsets = [0, 8], sizes = [8, 8], strides = [1, 1]} : vector<8x16xf32> to vector<8x8xf32>
    %144 = arith.truncf %143 : vector<8x8xf32> to vector<8x8xbf16>
    %145 = vector.extract_strided_slice %120 {offsets = [0, 8], sizes = [6, 8], strides = [1, 1]} : vector<6x16xf32> to vector<6x8xf32>
    %146 = arith.truncf %145 : vector<6x8xf32> to vector<6x8xbf16>
    %147 = vector.extract_strided_slice %121 {offsets = [0, 8], sizes = [6, 8], strides = [1, 1]} : vector<6x16xf32> to vector<6x8xf32>
    %148 = arith.truncf %147 : vector<6x8xf32> to vector<6x8xbf16>
    %cst_60 = arith.constant dense<0.000000e+00> : vector<8x6xf32>
    %149 = tpu.matmul %144, %146, %cst_60 {dimension_numbers = #tpu.dot_dimension_numbers<[1], [1], [0], [0], [0, 0, 1, 0], [], []>} : vector<8x8xbf16>, vector<6x8xbf16>, vector<8x6xf32> -> vector<8x6xf32>
    %cst_61 = arith.constant dense<0xFF800000> : vector<8xf32>
    %150 = vector.multi_reduction <maximumf>, %149, %cst_61 [1] : vector<8x6xf32> to vector<8xf32>
    %151 = vector.shape_cast %150 : vector<8xf32> to vector<8x1xf32>
    %152 = vector.broadcast %151 : vector<8x1xf32> to vector<8x6xf32>
    %153 = arith.subf %149, %152 : vector<8x6xf32>
    %154 = math.exp %153 : vector<8x6xf32>
    %cst_62 = arith.constant dense<0.000000e+00> : vector<8xf32>
    %155 = vector.multi_reduction <add>, %154, %cst_62 [1] : vector<8x6xf32> to vector<8xf32>
    %156 = vector.shape_cast %155 : vector<8xf32> to vector<8x1xf32>
    %157 = tpu.reciprocal %156 {approx = true} : vector<8x1xf32> -> vector<8x1xf32>
    %158 = vector.broadcast %157 : vector<8x1xf32> to vector<8x6xf32>
    %159 = arith.mulf %154, %158 : vector<8x6xf32>
    %160 = arith.truncf %159 : vector<8x6xf32> to vector<8x6xbf16>
    %cst_63 = arith.constant dense<0.000000e+00> : vector<8x8xf32>
    %161 = tpu.matmul %160, %148, %cst_63 {dimension_numbers = #tpu.dot_dimension_numbers<[1], [0], [0], [1], [0, 0, 1, 1], [], []>} : vector<8x6xbf16>, vector<6x8xbf16>, vector<8x8xf32> -> vector<8x8xf32>
    %162 = tpu.concatenate %142, %161 in 1 : vector<8x8xf32>, vector<8x8xf32> -> vector<8x16xf32>
    %163 = arith.truncf %162 : vector<8x16xf32> to vector<8x16xbf16>
    %c0_64 = arith.constant 0 : index
    %c0_65 = arith.constant 0 : index
    %c0_66 = arith.constant 0 : index
    %164 = vector.load %arg16[%c0_64, %c0_65, %c0_66] : memref<1x16x32xbf16, #tpu.memory_space<vmem>>, vector<1x16x32xbf16>
    %165 = vector.shape_cast %164 : vector<1x16x32xbf16> to vector<16x32xbf16>
    %cst_67 = arith.constant dense<0.000000e+00> : vector<8x32xf32>
    %166 = tpu.matmul %163, %165, %cst_67 {dimension_numbers = #tpu.dot_dimension_numbers<[1], [0], [0], [1], [0, 0, 1, 1], [], []>} : vector<8x16xbf16>, vector<16x32xbf16>, vector<8x32xf32> -> vector<8x32xf32>
    %167 = arith.addf %87, %166 : vector<8x32xf32>
    %c0_68 = arith.constant 0 : index
    %c0_69 = arith.constant 0 : index
    %c0_70 = arith.constant 0 : index
    %168 = vector.load %arg17[%c0_68, %c0_69, %c0_70] : memref<1x1x32xf32, #tpu.memory_space<vmem>>, vector<1x1x32xf32>
    %169 = vector.shape_cast %168 : vector<1x1x32xf32> to vector<1x32xf32>
    %170 = vector.broadcast %169 : vector<1x32xf32> to vector<8x32xf32>
    %171 = arith.addf %167, %170 : vector<8x32xf32>
    %cst_71 = arith.constant dense<0.000000e+00> : vector<8xf32>
    %172 = vector.multi_reduction <add>, %171, %cst_71 [1] : vector<8x32xf32> to vector<8xf32>
    %173 = vector.shape_cast %172 : vector<8xf32> to vector<8x1xf32>
    %cst_72 = arith.constant 3.200000e+01 : f32
    %174 = vector.broadcast %cst_72 : f32 to vector<8x1xf32>
    %175 = arith.divf %173, %174 : vector<8x1xf32>
    %176 = vector.broadcast %175 : vector<8x1xf32> to vector<8x32xf32>
    %177 = arith.subf %171, %176 : vector<8x32xf32>
    %178 = arith.mulf %177, %177 : vector<8x32xf32>
    %cst_73 = arith.constant dense<0.000000e+00> : vector<8xf32>
    %179 = vector.multi_reduction <add>, %178, %cst_73 [1] : vector<8x32xf32> to vector<8xf32>
    %180 = vector.shape_cast %179 : vector<8xf32> to vector<8x1xf32>
    %cst_74 = arith.constant 3.200000e+01 : f32
    %181 = vector.broadcast %cst_74 : f32 to vector<8x1xf32>
    %182 = arith.divf %180, %181 : vector<8x1xf32>
    %cst_75 = arith.constant 9.99999974E-6 : f32
    %183 = vector.broadcast %cst_75 : f32 to vector<8x1xf32>
    %184 = arith.addf %182, %183 : vector<8x1xf32>
    %185 = math.rsqrt %184 : vector<8x1xf32>
    %186 = vector.broadcast %185 : vector<8x1xf32> to vector<8x32xf32>
    %187 = arith.mulf %177, %186 : vector<8x32xf32>
    %c0_76 = arith.constant 0 : index
    %c0_77 = arith.constant 0 : index
    %c0_78 = arith.constant 0 : index
    %188 = vector.load %arg18[%c0_76, %c0_77, %c0_78] : memref<1x1x32xf32, #tpu.memory_space<vmem>>, vector<1x1x32xf32>
    %189 = vector.shape_cast %188 : vector<1x1x32xf32> to vector<1x32xf32>
    %190 = vector.broadcast %189 : vector<1x32xf32> to vector<8x32xf32>
    %191 = arith.mulf %187, %190 : vector<8x32xf32>
    %c0_79 = arith.constant 0 : index
    %c0_80 = arith.constant 0 : index
    %c0_81 = arith.constant 0 : index
    %192 = vector.load %arg19[%c0_79, %c0_80, %c0_81] : memref<1x1x32xf32, #tpu.memory_space<vmem>>, vector<1x1x32xf32>
    %193 = vector.shape_cast %192 : vector<1x1x32xf32> to vector<1x32xf32>
    %194 = vector.broadcast %193 : vector<1x32xf32> to vector<8x32xf32>
    %195 = arith.addf %191, %194 : vector<8x32xf32>
    %196 = arith.truncf %195 : vector<8x32xf32> to vector<8x32xbf16>
    %c0_82 = arith.constant 0 : index
    %c0_83 = arith.constant 0 : index
    %c0_84 = arith.constant 0 : index
    %197 = vector.load %arg20[%c0_82, %c0_83, %c0_84] : memref<1x32x64xbf16, #tpu.memory_space<vmem>>, vector<1x32x64xbf16>
    %198 = vector.shape_cast %197 : vector<1x32x64xbf16> to vector<32x64xbf16>
    %cst_85 = arith.constant dense<0.000000e+00> : vector<8x64xf32>
    %199 = tpu.matmul %196, %198, %cst_85 {dimension_numbers = #tpu.dot_dimension_numbers<[1], [0], [0], [1], [0, 0, 1, 1], [], []>} : vector<8x32xbf16>, vector<32x64xbf16>, vector<8x64xf32> -> vector<8x64xf32>
    %c0_86 = arith.constant 0 : index
    %c0_87 = arith.constant 0 : index
    %c0_88 = arith.constant 0 : index
    %200 = vector.load %arg21[%c0_86, %c0_87, %c0_88] : memref<1x1x64xf32, #tpu.memory_space<vmem>>, vector<1x1x64xf32>
    %201 = vector.shape_cast %200 : vector<1x1x64xf32> to vector<1x64xf32>
    %202 = vector.broadcast %201 : vector<1x64xf32> to vector<8x64xf32>
    %203 = arith.addf %199, %202 : vector<8x64xf32>
    %cst_89 = arith.constant 0.707106769 : f32
    %204 = vector.broadcast %cst_89 : f32 to vector<8x64xf32>
    %205 = arith.mulf %203, %204 : vector<8x64xf32>
    %206 = math.absf %205 : vector<8x64xf32>
    %cst_90 = arith.constant 0.327591091 : f32
    %207 = vector.broadcast %cst_90 : f32 to vector<8x64xf32>
    %208 = arith.mulf %207, %206 : vector<8x64xf32>
    %cst_91 = arith.constant 1.000000e+00 : f32
    %209 = vector.broadcast %cst_91 : f32 to vector<8x64xf32>
    %210 = arith.addf %209, %208 : vector<8x64xf32>
    %cst_92 = arith.constant 1.000000e+00 : f32
    %211 = vector.broadcast %cst_92 : f32 to vector<8x64xf32>
    %212 = arith.divf %211, %210 : vector<8x64xf32>
    %cst_93 = arith.constant 1.06140542 : f32
    %213 = vector.broadcast %cst_93 : f32 to vector<8x64xf32>
    %214 = arith.mulf %213, %212 : vector<8x64xf32>
    %cst_94 = arith.constant -1.45315206 : f32
    %215 = vector.broadcast %cst_94 : f32 to vector<8x64xf32>
    %216 = arith.addf %214, %215 : vector<8x64xf32>
    %217 = arith.mulf %216, %212 : vector<8x64xf32>
    %cst_95 = arith.constant 1.42141378 : f32
    %218 = vector.broadcast %cst_95 : f32 to vector<8x64xf32>
    %219 = arith.addf %217, %218 : vector<8x64xf32>
    %220 = arith.mulf %219, %212 : vector<8x64xf32>
    %cst_96 = arith.constant -0.284496725 : f32
    %221 = vector.broadcast %cst_96 : f32 to vector<8x64xf32>
    %222 = arith.addf %220, %221 : vector<8x64xf32>
    %223 = arith.mulf %222, %212 : vector<8x64xf32>
    %cst_97 = arith.constant 0.254829586 : f32
    %224 = vector.broadcast %cst_97 : f32 to vector<8x64xf32>
    %225 = arith.addf %223, %224 : vector<8x64xf32>
    %226 = arith.mulf %225, %212 : vector<8x64xf32>
    %cst_98 = arith.constant 0.000000e+00 : f32
    %227 = vector.broadcast %cst_98 : f32 to vector<8x64xf32>
    %228 = arith.subf %227, %206 : vector<8x64xf32>
    %229 = arith.mulf %228, %206 : vector<8x64xf32>
    %230 = math.exp %229 : vector<8x64xf32>
    %231 = arith.mulf %226, %230 : vector<8x64xf32>
    %cst_99 = arith.constant 1.000000e+00 : f32
    %232 = vector.broadcast %cst_99 : f32 to vector<8x64xf32>
    %233 = arith.subf %232, %231 : vector<8x64xf32>
    %cst_100 = arith.constant 0.000000e+00 : f32
    %234 = vector.broadcast %cst_100 : f32 to vector<8x64xf32>
    %235 = arith.cmpf oge, %205, %234 : vector<8x64xf32>
    %cst_101 = arith.constant 0.000000e+00 : f32
    %236 = vector.broadcast %cst_101 : f32 to vector<8x64xf32>
    %237 = arith.subf %236, %233 : vector<8x64xf32>
    %238 = arith.select %235, %233, %237 : vector<8x64xi1>, vector<8x64xf32>
    %cst_102 = arith.constant 5.000000e-01 : f32
    %239 = vector.broadcast %cst_102 : f32 to vector<8x64xf32>
    %240 = arith.mulf %239, %203 : vector<8x64xf32>
    %cst_103 = arith.constant 1.000000e+00 : f32
    %241 = vector.broadcast %cst_103 : f32 to vector<8x64xf32>
    %242 = arith.addf %241, %238 : vector<8x64xf32>
    %243 = arith.mulf %240, %242 : vector<8x64xf32>
    %244 = arith.truncf %243 : vector<8x64xf32> to vector<8x64xbf16>
    %c0_104 = arith.constant 0 : index
    %c0_105 = arith.constant 0 : index
    %c0_106 = arith.constant 0 : index
    %245 = vector.load %arg22[%c0_104, %c0_105, %c0_106] : memref<1x64x32xbf16, #tpu.memory_space<vmem>>, vector<1x64x32xbf16>
    %246 = vector.shape_cast %245 : vector<1x64x32xbf16> to vector<64x32xbf16>
    %cst_107 = arith.constant dense<0.000000e+00> : vector<8x32xf32>
    %247 = tpu.matmul %244, %246, %cst_107 {dimension_numbers = #tpu.dot_dimension_numbers<[1], [0], [0], [1], [0, 0, 1, 1], [], []>} : vector<8x64xbf16>, vector<64x32xbf16>, vector<8x32xf32> -> vector<8x32xf32>
    %248 = arith.addf %171, %247 : vector<8x32xf32>
    %c0_108 = arith.constant 0 : index
    %c0_109 = arith.constant 0 : index
    %c0_110 = arith.constant 0 : index
    %249 = vector.load %arg23[%c0_108, %c0_109, %c0_110] : memref<1x1x32xf32, #tpu.memory_space<vmem>>, vector<1x1x32xf32>
    %250 = vector.shape_cast %249 : vector<1x1x32xf32> to vector<1x32xf32>
    %251 = vector.broadcast %250 : vector<1x32xf32> to vector<8x32xf32>
    %252 = arith.addf %248, %251 : vector<8x32xf32>
    %c0_111 = arith.constant 0 : index
    %c0_112 = arith.constant 0 : index
    %c0_113 = arith.constant 0 : index
    %253 = vector.load %arg24[%c0_111, %c0_112, %c0_113] : memref<1x8x32xf32, #tpu.memory_space<vmem>>, vector<1x8x32xf32>
    %254 = vector.shape_cast %253 : vector<1x8x32xf32> to vector<8x32xf32>
    %255 = vector.shape_cast %252 : vector<8x32xf32> to vector<1x8x32xf32>
    tpu.vector_store %arg24[%c0_111, %c0_112, %c0_113], %255 {strides = array<i32>} : memref<1x8x32xf32, #tpu.memory_space<vmem>>, vector<1x8x32xf32>,
    return
  }
  func.func @transform_0(%arg0: i32, %arg1: i32) -> (i32, i32, i32) {
    %c0_i32 = arith.constant 0 : i32
    %c0_i32_0 = arith.constant 0 : i32
    %c0_i32_1 = arith.constant 0 : i32
    return %arg0, %c0_i32, %c0_i32_0 : i32, i32, i32
  }
  func.func @transform_1(%arg0: i32, %arg1: i32) -> (i32, i32, i32) {
    %c0_i32 = arith.constant 0 : i32
    %c0_i32_0 = arith.constant 0 : i32
    %c0_i32_1 = arith.constant 0 : i32
    %c0_i32_2 = arith.constant 0 : i32
    return %c0_i32, %c0_i32_0, %c0_i32_1 : i32, i32, i32
  }
  func.func @transform_2(%arg0: i32, %arg1: i32) -> (i32, i32, i32) {
    %c0_i32 = arith.constant 0 : i32
    %c0_i32_0 = arith.constant 0 : i32
    %c0_i32_1 = arith.constant 0 : i32
    return %arg0, %c0_i32, %c0_i32_0 : i32, i32, i32
  }
  func.func @transform_3(%arg0: i32, %arg1: i32) -> (i32, i32) {
    %c0_i32 = arith.constant 0 : i32
    %c0_i32_0 = arith.constant 0 : i32
    %c0_i32_1 = arith.constant 0 : i32
    return %c0_i32, %c0_i32_0 : i32, i32
  }
  func.func @transform_4(%arg0: i32, %arg1: i32) -> (i32, i32) {
    %c0_i32 = arith.constant 0 : i32
    %c0_i32_0 = arith.constant 0 : i32
    %c0_i32_1 = arith.constant 0 : i32
    return %c0_i32, %c0_i32_0 : i32, i32
  }
  func.func @transform_5(%arg0: i32, %arg1: i32) -> (i32, i32, i32) {
    %c0_i32 = arith.constant 0 : i32
    %c0_i32_0 = arith.constant 0 : i32
    %c0_i32_1 = arith.constant 0 : i32
    return %arg1, %c0_i32, %c0_i32_0 : i32, i32, i32
  }
  func.func @transform_6(%arg0: i32, %arg1: i32) -> (i32, i32, i32) {
    %c0_i32 = arith.constant 0 : i32
    %c0_i32_0 = arith.constant 0 : i32
    %c0_i32_1 = arith.constant 0 : i32
    return %arg1, %c0_i32, %c0_i32_0 : i32, i32, i32
  }
  func.func @transform_7(%arg0: i32, %arg1: i32) -> (i32, i32, i32) {
    %c0_i32 = arith.constant 0 : i32
    %c0_i32_0 = arith.constant 0 : i32
    %c0_i32_1 = arith.constant 0 : i32
    return %arg1, %c0_i32, %c0_i32_0 : i32, i32, i32
  }
  func.func @transform_8(%arg0: i32, %arg1: i32) -> (i32, i32, i32) {
    %c0_i32 = arith.constant 0 : i32
    %c0_i32_0 = arith.constant 0 : i32
    %c0_i32_1 = arith.constant 0 : i32
    return %arg1, %c0_i32, %c0_i32_0 : i32, i32, i32
  }
  func.func @transform_9(%arg0: i32, %arg1: i32) -> (i32, i32, i32) {
    %c0_i32 = arith.constant 0 : i32
    %c0_i32_0 = arith.constant 0 : i32
    %c0_i32_1 = arith.constant 0 : i32
    return %arg1, %c0_i32, %c0_i32_0 : i32, i32, i32
  }
  func.func @transform_10(%arg0: i32, %arg1: i32) -> (i32, i32, i32) {
    %c0_i32 = arith.constant 0 : i32
    %c0_i32_0 = arith.constant 0 : i32
    %c0_i32_1 = arith.constant 0 : i32
    return %arg1, %c0_i32, %c0_i32_0 : i32, i32, i32
  }
  func.func @transform_11(%arg0: i32, %arg1: i32) -> (i32, i32, i32) {
    %c0_i32 = arith.constant 0 : i32
    %c0_i32_0 = arith.constant 0 : i32
    %c0_i32_1 = arith.constant 0 : i32
    return %arg1, %c0_i32, %c0_i32_0 : i32, i32, i32
  }
  func.func @transform_12(%arg0: i32, %arg1: i32) -> (i32, i32, i32) {
    %c0_i32 = arith.constant 0 : i32
    %c0_i32_0 = arith.constant 0 : i32
    %c0_i32_1 = arith.constant 0 : i32
    return %arg1, %c0_i32, %c0_i32_0 : i32, i32, i32
  }
  func.func @transform_13(%arg0: i32, %arg1: i32) -> (i32, i32, i32) {
    %c0_i32 = arith.constant 0 : i32
    %c0_i32_0 = arith.constant 0 : i32
    %c0_i32_1 = arith.constant 0 : i32
    return %arg1, %c0_i32, %c0_i32_0 : i32, i32, i32
  }
  func.func @transform_14(%arg0: i32, %arg1: i32) -> (i32, i32, i32) {
    %c0_i32 = arith.constant 0 : i32
    %c0_i32_0 = arith.constant 0 : i32
    %c0_i32_1 = arith.constant 0 : i32
    return %arg1, %c0_i32, %c0_i32_0 : i32, i32, i32
  }
  func.func @transform_15(%arg0: i32, %arg1: i32) -> (i32, i32, i32) {
    %c0_i32 = arith.constant 0 : i32
    %c0_i32_0 = arith.constant 0 : i32
    %c0_i32_1 = arith.constant 0 : i32
    return %arg1, %c0_i32, %c0_i32_0 : i32, i32, i32
  }
  func.func @transform_16(%arg0: i32, %arg1: i32) -> (i32, i32, i32) {
    %c0_i32 = arith.constant 0 : i32
    %c0_i32_0 = arith.constant 0 : i32
    %c0_i32_1 = arith.constant 0 : i32
    return %arg1, %c0_i32, %c0_i32_0 : i32, i32, i32
  }
  func.func @transform_17(%arg0: i32, %arg1: i32) -> (i32, i32, i32) {
    %c0_i32 = arith.constant 0 : i32
    %c0_i32_0 = arith.constant 0 : i32
    %c0_i32_1 = arith.constant 0 : i32
    return %arg1, %c0_i32, %c0_i32_0 : i32, i32, i32
  }
  func.func @transform_18(%arg0: i32, %arg1: i32) -> (i32, i32, i32) {
    %c0_i32 = arith.constant 0 : i32
    %c0_i32_0 = arith.constant 0 : i32
    %c0_i32_1 = arith.constant 0 : i32
    return %arg1, %c0_i32, %c0_i32_0 : i32, i32, i32
  }
  func.func @transform_19(%arg0: i32, %arg1: i32) -> (i32, i32, i32) {
    %c0_i32 = arith.constant 0 : i32
    %c0_i32_0 = arith.constant 0 : i32
    %c0_i32_1 = arith.constant 0 : i32
    return %arg1, %c0_i32, %c0_i32_0 : i32, i32, i32
  }
  func.func @transform_20(%arg0: i32, %arg1: i32) -> (i32, i32, i32) {
    %c0_i32 = arith.constant 0 : i32
    %c0_i32_0 = arith.constant 0 : i32
    %c0_i32_1 = arith.constant 0 : i32
    return %arg1, %c0_i32, %c0_i32_0 : i32, i32, i32
  }
  func.func @transform_21(%arg0: i32, %arg1: i32) -> (i32, i32, i32) {
    %c0_i32 = arith.constant 0 : i32
    %c0_i32_0 = arith.constant 0 : i32
    %c0_i32_1 = arith.constant 0 : i32
    return %arg1, %c0_i32, %c0_i32_0 : i32, i32, i32
  }
  func.func @transform_22(%arg0: i32, %arg1: i32) -> (i32, i32, i32) {
    %c0_i32 = arith.constant 0 : i32
    %c0_i32_0 = arith.constant 0 : i32
    %c0_i32_1 = arith.constant 0 : i32
    return %arg0, %c0_i32, %c0_i32_0 : i32, i32, i32
  }
}

</mosaic_0001>

<llo_original>
// kernel: transformer_decoder_forward.1
$region0: #{transformer_decoder_forward.1}
  #allocation0 [shape = 'u32[]', space=smem, size = 0x4, offset = 0x4, fixed_abs, tag = 'smem constant byte address 0x4 - core index']
  #allocation1 [shape = 'u32[72,128]{1,0:T(1,128)}', space=vmem, size = 0x9000, scoped, tag = 'internal scratch']
  %s0 = inlined_call_operand.vmem [shape: f32[2,8,16], index: 0, kind: input, shape index: {}]
  %s1 = inlined_call_operand.vmem [shape: f32[1,8,32], index: 1, kind: input, shape index: {}]
  %s2 = inlined_call_operand.vmem [shape: f32[2,6,24], index: 2, kind: input, shape index: {}]
  %s3 = inlined_call_operand.hbm [shape: bf16[16,32], index: 3, kind: input, shape index: {}]
  %s4 = inlined_call_operand.hbm [shape: f32[1,32], index: 4, kind: input, shape index: {}]
  %s5 = inlined_call_operand.vmem [shape: f32[2,1,32], index: 5, kind: input, shape index: {}]
  %s6 = inlined_call_operand.vmem [shape: f32[2,1,32], index: 6, kind: input, shape index: {}]
  %s7 = inlined_call_operand.vmem [shape: bf16[2,32,48], index: 7, kind: input, shape index: {}]
  %s8 = inlined_call_operand.vmem [shape: bf16[2,16,32], index: 8, kind: input, shape index: {}]
  %s9 = inlined_call_operand.hbm [shape: f32[2,1,32], index: 9, kind: input, shape index: {}]
  %s10 = inlined_call_operand.hbm [shape: f32[2,1,32], index: 10, kind: input, shape index: {}]
  %s11 = inlined_call_operand.hbm [shape: f32[2,1,32], index: 11, kind: input, shape index: {}]
  %s12 = inlined_call_operand.vmem [shape: bf16[2,32,16], index: 12, kind: input, shape index: {}]
  %s13 = inlined_call_operand.vmem [shape: bf16[2,24,32], index: 13, kind: input, shape index: {}]
  %s14 = inlined_call_operand.hbm [shape: bf16[2,16,32], index: 14, kind: input, shape index: {}]
  %s15 = inlined_call_operand.hbm [shape: f32[2,1,32], index: 15, kind: input, shape index: {}]
  %s16 = inlined_call_operand.hbm [shape: f32[2,1,32], index: 16, kind: input, shape index: {}]
  %s17 = inlined_call_operand.hbm [shape: f32[2,1,32], index: 17, kind: input, shape index: {}]
  %s18 = inlined_call_operand.vmem [shape: bf16[2,32,64], index: 18, kind: input, shape index: {}]
  %s19 = inlined_call_operand.hbm [shape: f32[2,1,64], index: 19, kind: input, shape index: {}]
  %s20 = inlined_call_operand.vmem [shape: bf16[2,64,32], index: 20, kind: input, shape index: {}]
  %s21 = inlined_call_operand.hbm [shape: f32[2,1,32], index: 21, kind: input, shape index: {}]
  %s22 = inlined_call_operand.hbm [shape: f32[2,8,32], index: 22, kind: output, shape index: {}]
  %s23 = sld [smem:[#allocation0]]
  $region169: #{transformer_decoder_forward.1} parent=0
    _
  %s25 = ssub.s32 1, %s23
  %s26 = scalar_select 0, %s25, %s23
  $region1: #{transformer_decoder_forward.1} parent=0
    #allocation2 [shape = 'u8[4096]{0}', space=vmem, size = 0x1000, scoped, tag = 'input window, operand 3, single buffered']
    #allocation3 [shape = 's32[2]{0}', space=sflag, size = 0x8, scoped, tag = 'scoped memory for transformer_decoder_forward.1']
    #allocation4 [shape = 's32[2]{0}', space=sflag, size = 0x8, scoped, tag = 'scoped memory for transformer_decoder_forward.1']
    #allocation5 [shape = 'u8[512]{0}', space=vmem, size = 0x400, scoped, tag = 'input window, operand 4, single buffered']
    #allocation6 [shape = 's32[1]{0}', space=sflag, size = 0x4, scoped, tag = 'scoped memory for transformer_decoder_forward.1']
    #allocation7 [shape = 'u8[1024]{0}', space=vmem, size = 0x400, scoped, tag = 'input window, operand 9']
    #allocation8 [shape = 'u8[1024]{0}', space=vmem, size = 0x400, scoped, tag = 'input window, operand 10']
    #allocation9 [shape = 'u8[1024]{0}', space=vmem, size = 0x400, scoped, tag = 'input window, operand 11']
    #allocation10 [shape = 'u8[8192]{0}', space=vmem, size = 0x2000, scoped, tag = 'input window, operand 14']
    #allocation11 [shape = 'u8[1024]{0}', space=vmem, size = 0x400, scoped, tag = 'input window, operand 15']
    #allocation12 [shape = 'u8[1024]{0}', space=vmem, size = 0x400, scoped, tag = 'input window, operand 16']
    #allocation13 [shape = 'u8[1024]{0}', space=vmem, size = 0x400, scoped, tag = 'input window, operand 17']
    #allocation14 [shape = 'u8[1024]{0}', space=vmem, size = 0x400, scoped, tag = 'input window, operand 19']
    #allocation15 [shape = 'u8[1024]{0}', space=vmem, size = 0x400, scoped, tag = 'input window, operand 21']
    #allocation16 [shape = 'u8[8192]{0}', space=vmem, size = 0x2000, scoped, tag = 'output window, operand 0']
    %27 = vsyncpa [#allocation3], 0
    %28 = vsyncpa [#allocation6], 0
    %29 = vsyncpa [#allocation4], 0
    %s30 = scalar_lea.sflag [#allocation4], 1
    %31 = vsyncpa %s30, 0
    loop: start=0, step=1, limit=6
    $region2: #{transformer_decoder_forward.1} parent=1 // loop_pre_header
      _
    $region3: #{transformer_decoder_forward.1} parent=1 // loop_header
      %s33 = sphi 0, %s37
      %p34 = scmp.ge.s32.totalorder %s33, 6
      %s40 = sphi 0, %s52
      %s41 = sphi 0, %s48
      %s42 = sphi 0, %s40
      %s43 = sphi 0, %s41
      %s44 = sphi 0, %s42
      %s45 = sphi 0, %s43
      %s55 = sphi 0, %s57
      %s58 = sphi 0, %s55
      %s59 = sphi 0, %s58
      %s75 = sphi 0, %s59
      %s79 = sphi 0, %s79
      %s81 = sphi 0, %s79
      %s82 = sphi 0, %s81
      %s96 = sphi 0, %s82
      %s102 = sphi 0, %s104
      %s105 = sphi 0, %s102
      %s106 = sphi 0, %s105
      %s122 = sphi 0, %s106
      %s126 = sphi 0, %s126
      %s128 = sphi 0, %s126
      %s129 = sphi 0, %s128
      %s143 = sphi 0, %s129
      %s147 = sphi 0, %s147
      %s149 = sphi 0, %s147
      %s150 = sphi 0, %s149
      %s164 = sphi 0, %s150
      %s170 = sphi 0, %s172
      %s173 = sphi 0, %s170
      %s174 = sphi 0, %s173
      %s190 = sphi 0, %s174
      %s196 = sphi 0, %s198
      %s199 = sphi 0, %s196
      %s200 = sphi 0, %s199
      %s216 = sphi 0, %s200
      %s222 = sphi 0, %s224
      %s225 = sphi 0, %s222
      %s226 = sphi 0, %s225
      %s242 = sphi 0, %s226
      %s248 = sphi 0, %s250
      %s251 = sphi 0, %s248
      %s252 = sphi 0, %s251
      %s268 = sphi 0, %s252
      %s274 = sphi 0, %s276
      %s277 = sphi 0, %s274
      %s278 = sphi 0, %s277
      %s294 = sphi 0, %s278
      %s300 = sphi 0, %s302
      %s303 = sphi 0, %s300
      %s304 = sphi 0, %s303
      %s320 = sphi 0, %s304
      %s326 = sphi 0, %s328
      %s329 = sphi 0, %s326
      %s330 = sphi 0, %s329
      %s346 = sphi 0, %s330
      %s352 = sphi 0, %s354
      %s355 = sphi 0, %s352
      %s356 = sphi 0, %s355
      %s372 = sphi 0, %s356
      %s378 = sphi 0, %s380
      %s381 = sphi 0, %s378
      %s382 = sphi 0, %s381
      %s398 = sphi 0, %s382
      %s404 = sphi 0, %s406
      %s407 = sphi 0, %s404
      %s408 = sphi 0, %s407
      %s424 = sphi 0, %s408
      %s430 = sphi 0, %s432
      %s433 = sphi 0, %s430
      %s434 = sphi 0, %s433
      %s450 = sphi 0, %s434
      %s456 = sphi 0, %s458
      %s459 = sphi 0, %s456
      %s460 = sphi 0, %s459
      %s476 = sphi 0, %s460
      %s482 = sphi 0, %s484
      %s485 = sphi 0, %s482
      %s486 = sphi 0, %s485
      %s502 = sphi 0, %s486
      %s508 = sphi 0, %s510
      %s511 = sphi 0, %s508
      %s512 = sphi 0, %s511
      %s528 = sphi 0, %s512
      %s534 = sphi 0, %s536
      %s537 = sphi 0, %s534
      %s538 = sphi 0, %s537
      %s554 = sphi 0, %s538
      %s560 = sphi 0, %s562
      %s563 = sphi 0, %s560
      %s564 = sphi 0, %s563
      %s580 = sphi 0, %s564
      %s586 = sphi 0, %s588
      %s589 = sphi 0, %s586
      %s590 = sphi 0, %s589
      %s606 = sphi 0, %s590
      %s612 = sphi 0, %s614
      %s615 = sphi 0, %s612
      %s616 = sphi 0, %s615
      %s632 = sphi 0, %s616
    $region4: #{transformer_decoder_forward.1} parent=1 // loop_header_branch
      %36 = sbr.rel (%p34) target = $region8
    $region5: #{transformer_decoder_forward.1} parent=1 // loop_body
      %s38 = ssub.s32 %s33, 1
      %s39 = ssub.s32 %s33, 2
      %s46 = sadd.s32 1, %s41
      %p47 = scmp.ge.s32.totalorder %s46, 2
      %s48 = scalar_select %p47, 0, %s46
      %s49 = sadd.s32 1, %s40
      %s50 = scalar_select %p47, %s49, %s40
      %p51 = scmp.ge.s32.totalorder %s50, 2
      %s52 = scalar_select %p51, 0, %s50
      %s53 = ssub.s32 %s40, %s52
      %p54 = scmp.eq.s32.totalorder %s53, 0
      %s56 = sadd.s32 %s55, 1
      %s57 = scalar_select %p54, %s55, %s56
      %p60 = pneg %p54
      %p61 = scmp.eq.s32.totalorder %s33, 3
      %p62 = por %p60, %p61
      %p63 = scmp.ne.s32.totalorder %s55, %s58
      %p64 = scmp.eq.s32.totalorder %s33, 0
      %p65 = por %p63, %p64
      %p66 = scmp.ne.s32.totalorder %s55, %s58
      %p67 = scmp.eq.s32.totalorder %s38, 3
      %p68 = por %p66, %p67
      %p69 = scmp.ne.s32.totalorder %s58, %s59
      %p70 = scmp.eq.s32.totalorder %s38, 0
      %p71 = por %p69, %p70
      %p72 = scmp.ne.s32.totalorder %s58, %s59
      %p73 = scmp.eq.s32.totalorder %s39, 3
      %p74 = por %p72, %p73
      %p76 = scmp.ne.s32.totalorder %s59, %s75
      %p77 = scmp.eq.s32.totalorder %s39, 0
      %p78 = por %p76, %p77
      %s80 = sadd.s32 %s79, 1
      %p83 = scmp.eq.s32.totalorder %s33, 3
      %p84 = scmp.ne.s32.totalorder %s79, %s81
      %p85 = scmp.eq.s32.totalorder %s33, 0
      %p86 = por %p84, %p85
      %p87 = scmp.ne.s32.totalorder %s79, %s81
      %p88 = scmp.eq.s32.totalorder %s38, 3
      %p89 = por %p87, %p88
      %p90 = scmp.ne.s32.totalorder %s81, %s82
      %p91 = scmp.eq.s32.totalorder %s38, 0
      %p92 = por %p90, %p91
      %p93 = scmp.ne.s32.totalorder %s81, %s82
      %p94 = scmp.eq.s32.totalorder %s39, 3
      %p95 = por %p93, %p94
      %p97 = scmp.ne.s32.totalorder %s82, %s96
      %p98 = scmp.eq.s32.totalorder %s39, 0
      %p99 = por %p97, %p98
      %s100 = ssub.s32 %s40, %s52
      %p101 = scmp.eq.s32.totalorder %s100, 0
      %s103 = sadd.s32 %s102, 1
      %s104 = scalar_select %p101, %s102, %s103
      %p107 = pneg %p101
      %p108 = scmp.eq.s32.totalorder %s33, 3
      %p109 = por %p107, %p108
      %p110 = scmp.ne.s32.totalorder %s102, %s105
      %p111 = scmp.eq.s32.totalorder %s33, 0
      %p112 = por %p110, %p111
      %p113 = scmp.ne.s32.totalorder %s102, %s105
      %p114 = scmp.eq.s32.totalorder %s38, 3
      %p115 = por %p113, %p114
      %p116 = scmp.ne.s32.totalorder %s105, %s106
      %p117 = scmp.eq.s32.totalorder %s38, 0
      %p118 = por %p116, %p117
      %p119 = scmp.ne.s32.totalorder %s105, %s106
      %p120 = scmp.eq.s32.totalorder %s39, 3
      %p121 = por %p119, %p120
      %p123 = scmp.ne.s32.totalorder %s106, %s122
      %p124 = scmp.eq.s32.totalorder %s39, 0
      %p125 = por %p123, %p124
      %s127 = sadd.s32 %s126, 1
      %p130 = scmp.eq.s32.totalorder %s33, 3
      %p131 = scmp.ne.s32.totalorder %s126, %s128
      %p132 = scmp.eq.s32.totalorder %s33, 0
      %p133 = por %p131, %p132
      %p134 = scmp.ne.s32.totalorder %s126, %s128
      %p135 = scmp.eq.s32.totalorder %s38, 3
      %p136 = por %p134, %p135
      %p137 = scmp.ne.s32.totalorder %s128, %s129
      %p138 = scmp.eq.s32.totalorder %s38, 0
      %p139 = por %p137, %p138
      %p140 = scmp.ne.s32.totalorder %s128, %s129
      %p141 = scmp.eq.s32.totalorder %s39, 3
      %p142 = por %p140, %p141
      %p144 = scmp.ne.s32.totalorder %s129, %s143
      %p145 = scmp.eq.s32.totalorder %s39, 0
      %p146 = por %p144, %p145
      %s148 = sadd.s32 %s147, 1
      %p151 = scmp.eq.s32.totalorder %s33, 3
      %p152 = scmp.ne.s32.totalorder %s147, %s149
      %p153 = scmp.eq.s32.totalorder %s33, 0
      %p154 = por %p152, %p153
      %p155 = scmp.ne.s32.totalorder %s147, %s149
      %p156 = scmp.eq.s32.totalorder %s38, 3
      %p157 = por %p155, %p156
      %p158 = scmp.ne.s32.totalorder %s149, %s150
      %p159 = scmp.eq.s32.totalorder %s38, 0
      %p160 = por %p158, %p159
      %p161 = scmp.ne.s32.totalorder %s149, %s150
      %p162 = scmp.eq.s32.totalorder %s39, 3
      %p163 = por %p161, %p162
      %p165 = scmp.ne.s32.totalorder %s150, %s164
      %p166 = scmp.eq.s32.totalorder %s39, 0
      %p167 = por %p165, %p166
      %s168 = ssub.s32 %s41, %s48
      %p169 = scmp.eq.s32.totalorder %s168, 0
      %s171 = sadd.s32 %s170, 1
      %s172 = scalar_select %p169, %s170, %s171
      %p175 = pneg %p169
      %p176 = scmp.eq.s32.totalorder %s33, 3
      %p177 = por %p175, %p176
      %p178 = scmp.ne.s32.totalorder %s170, %s173
      %p179 = scmp.eq.s32.totalorder %s33, 0
      %p180 = por %p178, %p179
      %p181 = scmp.ne.s32.totalorder %s170, %s173
      %p182 = scmp.eq.s32.totalorder %s38, 3
      %p183 = por %p181, %p182
      %p184 = scmp.ne.s32.totalorder %s173, %s174
      %p185 = scmp.eq.s32.totalorder %s38, 0
      %p186 = por %p184, %p185
      %p187 = scmp.ne.s32.totalorder %s173, %s174
      %p188 = scmp.eq.s32.totalorder %s39, 3
      %p189 = por %p187, %p188
      %p191 = scmp.ne.s32.totalorder %s174, %s190
      %p192 = scmp.eq.s32.totalorder %s39, 0
      %p193 = por %p191, %p192
      %s194 = ssub.s32 %s41, %s48
      %p195 = scmp.eq.s32.totalorder %s194, 0
      %s197 = sadd.s32 %s196, 1
      %s198 = scalar_select %p195, %s196, %s197
      %p201 = pneg %p195
      %p202 = scmp.eq.s32.totalorder %s33, 3
      %p203 = por %p201, %p202
      %p204 = scmp.ne.s32.totalorder %s196, %s199
      %p205 = scmp.eq.s32.totalorder %s33, 0
      %p206 = por %p204, %p205
      %p207 = scmp.ne.s32.totalorder %s196, %s199
      %p208 = scmp.eq.s32.totalorder %s38, 3
      %p209 = por %p207, %p208
      %p210 = scmp.ne.s32.totalorder %s199, %s200
      %p211 = scmp.eq.s32.totalorder %s38, 0
      %p212 = por %p210, %p211
      %p213 = scmp.ne.s32.totalorder %s199, %s200
      %p214 = scmp.eq.s32.totalorder %s39, 3
      %p215 = por %p213, %p214
      %p217 = scmp.ne.s32.totalorder %s200, %s216
      %p218 = scmp.eq.s32.totalorder %s39, 0
      %p219 = por %p217, %p218
      %s220 = ssub.s32 %s41, %s48
      %p221 = scmp.eq.s32.totalorder %s220, 0
      %s223 = sadd.s32 %s222, 1
      %s224 = scalar_select %p221, %s222, %s223
      %p227 = pneg %p221
      %p228 = scmp.eq.s32.totalorder %s33, 3
      %p229 = por %p227, %p228
      %p230 = scmp.ne.s32.totalorder %s222, %s225
      %p231 = scmp.eq.s32.totalorder %s33, 0
      %p232 = por %p230, %p231
      %p233 = scmp.ne.s32.totalorder %s222, %s225
      %p234 = scmp.eq.s32.totalorder %s38, 3
      %p235 = por %p233, %p234
      %p236 = scmp.ne.s32.totalorder %s225, %s226
      %p237 = scmp.eq.s32.totalorder %s38, 0
      %p238 = por %p236, %p237
      %p239 = scmp.ne.s32.totalorder %s225, %s226
      %p240 = scmp.eq.s32.totalorder %s39, 3
      %p241 = por %p239, %p240
      %p243 = scmp.ne.s32.totalorder %s226, %s242
      %p244 = scmp.eq.s32.totalorder %s39, 0
      %p245 = por %p243, %p244
      %s246 = ssub.s32 %s41, %s48
      %p247 = scmp.eq.s32.totalorder %s246, 0
      %s249 = sadd.s32 %s248, 1
      %s250 = scalar_select %p247, %s248, %s249
      %p253 = pneg %p247
      %p254 = scmp.eq.s32.totalorder %s33, 3
      %p255 = por %p253, %p254
      %p256 = scmp.ne.s32.totalorder %s248, %s251
      %p257 = scmp.eq.s32.totalorder %s33, 0
      %p258 = por %p256, %p257
      %p259 = scmp.ne.s32.totalorder %s248, %s251
      %p260 = scmp.eq.s32.totalorder %s38, 3
      %p261 = por %p259, %p260
      %p262 = scmp.ne.s32.totalorder %s251, %s252
      %p263 = scmp.eq.s32.totalorder %s38, 0
      %p264 = por %p262, %p263
      %p265 = scmp.ne.s32.totalorder %s251, %s252
      %p266 = scmp.eq.s32.totalorder %s39, 3
      %p267 = por %p265, %p266
      %p269 = scmp.ne.s32.totalorder %s252, %s268
      %p270 = scmp.eq.s32.totalorder %s39, 0
      %p271 = por %p269, %p270
      %s272 = ssub.s32 %s41, %s48
      %p273 = scmp.eq.s32.totalorder %s272, 0
      %s275 = sadd.s32 %s274, 1
      %s276 = scalar_select %p273, %s274, %s275
      %p279 = pneg %p273
      %p280 = scmp.eq.s32.totalorder %s33, 3
      %p281 = por %p279, %p280
      %p282 = scmp.ne.s32.totalorder %s274, %s277
      %p283 = scmp.eq.s32.totalorder %s33, 0
      %p284 = por %p282, %p283
      %p285 = scmp.ne.s32.totalorder %s274, %s277
      %p286 = scmp.eq.s32.totalorder %s38, 3
      %p287 = por %p285, %p286
      %p288 = scmp.ne.s32.totalorder %s277, %s278
      %p289 = scmp.eq.s32.totalorder %s38, 0
      %p290 = por %p288, %p289
      %p291 = scmp.ne.s32.totalorder %s277, %s278
      %p292 = scmp.eq.s32.totalorder %s39, 3
      %p293 = por %p291, %p292
      %p295 = scmp.ne.s32.totalorder %s278, %s294
      %p296 = scmp.eq.s32.totalorder %s39, 0
      %p297 = por %p295, %p296
      %s298 = ssub.s32 %s41, %s48
      %p299 = scmp.eq.s32.totalorder %s298, 0
      %s301 = sadd.s32 %s300, 1
      %s302 = scalar_select %p299, %s300, %s301
      %p305 = pneg %p299
      %p306 = scmp.eq.s32.totalorder %s33, 3
      %p307 = por %p305, %p306
      %p308 = scmp.ne.s32.totalorder %s300, %s303
      %p309 = scmp.eq.s32.totalorder %s33, 0
      %p310 = por %p308, %p309
      %p311 = scmp.ne.s32.totalorder %s300, %s303
      %p312 = scmp.eq.s32.totalorder %s38, 3
      %p313 = por %p311, %p312
      %p314 = scmp.ne.s32.totalorder %s303, %s304
      %p315 = scmp.eq.s32.totalorder %s38, 0
      %p316 = por %p314, %p315
      %p317 = scmp.ne.s32.totalorder %s303, %s304
      %p318 = scmp.eq.s32.totalorder %s39, 3
      %p319 = por %p317, %p318
      %p321 = scmp.ne.s32.totalorder %s304, %s320
      %p322 = scmp.eq.s32.totalorder %s39, 0
      %p323 = por %p321, %p322
      %s324 = ssub.s32 %s41, %s48
      %p325 = scmp.eq.s32.totalorder %s324, 0
      %s327 = sadd.s32 %s326, 1
      %s328 = scalar_select %p325, %s326, %s327
      %p331 = pneg %p325
      %p332 = scmp.eq.s32.totalorder %s33, 3
      %p333 = por %p331, %p332
      %p334 = scmp.ne.s32.totalorder %s326, %s329
      %p335 = scmp.eq.s32.totalorder %s33, 0
      %p336 = por %p334, %p335
      %p337 = scmp.ne.s32.totalorder %s326, %s329
      %p338 = scmp.eq.s32.totalorder %s38, 3
      %p339 = por %p337, %p338
      %p340 = scmp.ne.s32.totalorder %s329, %s330
      %p341 = scmp.eq.s32.totalorder %s38, 0
      %p342 = por %p340, %p341
      %p343 = scmp.ne.s32.totalorder %s329, %s330
      %p344 = scmp.eq.s32.totalorder %s39, 3
      %p345 = por %p343, %p344
      %p347 = scmp.ne.s32.totalorder %s330, %s346
      %p348 = scmp.eq.s32.totalorder %s39, 0
      %p349 = por %p347, %p348
      %s350 = ssub.s32 %s41, %s48
      %p351 = scmp.eq.s32.totalorder %s350, 0
      %s353 = sadd.s32 %s352, 1
      %s354 = scalar_select %p351, %s352, %s353
      %p357 = pneg %p351
      %p358 = scmp.eq.s32.totalorder %s33, 3
      %p359 = por %p357, %p358
      %p360 = scmp.ne.s32.totalorder %s352, %s355
      %p361 = scmp.eq.s32.totalorder %s33, 0
      %p362 = por %p360, %p361
      %p363 = scmp.ne.s32.totalorder %s352, %s355
      %p364 = scmp.eq.s32.totalorder %s38, 3
      %p365 = por %p363, %p364
      %p366 = scmp.ne.s32.totalorder %s355, %s356
      %p367 = scmp.eq.s32.totalorder %s38, 0
      %p368 = por %p366, %p367
      %p369 = scmp.ne.s32.totalorder %s355, %s356
      %p370 = scmp.eq.s32.totalorder %s39, 3
      %p371 = por %p369, %p370
      %p373 = scmp.ne.s32.totalorder %s356, %s372
      %p374 = scmp.eq.s32.totalorder %s39, 0
      %p375 = por %p373, %p374
      %s376 = ssub.s32 %s41, %s48
      %p377 = scmp.eq.s32.totalorder %s376, 0
      %s379 = sadd.s32 %s378, 1
      %s380 = scalar_select %p377, %s378, %s379
      %p383 = pneg %p377
      %p384 = scmp.eq.s32.totalorder %s33, 3
      %p385 = por %p383, %p384
      %p386 = scmp.ne.s32.totalorder %s378, %s381
      %p387 = scmp.eq.s32.totalorder %s33, 0
      %p388 = por %p386, %p387
      %p389 = scmp.ne.s32.totalorder %s378, %s381
      %p390 = scmp.eq.s32.totalorder %s38, 3
      %p391 = por %p389, %p390
      %p392 = scmp.ne.s32.totalorder %s381, %s382
      %p393 = scmp.eq.s32.totalorder %s38, 0
      %p394 = por %p392, %p393
      %p395 = scmp.ne.s32.totalorder %s381, %s382
      %p396 = scmp.eq.s32.totalorder %s39, 3
      %p397 = por %p395, %p396
      %p399 = scmp.ne.s32.totalorder %s382, %s398
      %p400 = scmp.eq.s32.totalorder %s39, 0
      %p401 = por %p399, %p400
      %s402 = ssub.s32 %s41, %s48
      %p403 = scmp.eq.s32.totalorder %s402, 0
      %s405 = sadd.s32 %s404, 1
      %s406 = scalar_select %p403, %s404, %s405
      %p409 = pneg %p403
      %p410 = scmp.eq.s32.totalorder %s33, 3
      %p411 = por %p409, %p410
      %p412 = scmp.ne.s32.totalorder %s404, %s407
      %p413 = scmp.eq.s32.totalorder %s33, 0
      %p414 = por %p412, %p413
      %p415 = scmp.ne.s32.totalorder %s404, %s407
      %p416 = scmp.eq.s32.totalorder %s38, 3
      %p417 = por %p415, %p416
      %p418 = scmp.ne.s32.totalorder %s407, %s408
      %p419 = scmp.eq.s32.totalorder %s38, 0
      %p420 = por %p418, %p419
      %p421 = scmp.ne.s32.totalorder %s407, %s408
      %p422 = scmp.eq.s32.totalorder %s39, 3
      %p423 = por %p421, %p422
      %p425 = scmp.ne.s32.totalorder %s408, %s424
      %p426 = scmp.eq.s32.totalorder %s39, 0
      %p427 = por %p425, %p426
      %s428 = ssub.s32 %s41, %s48
      %p429 = scmp.eq.s32.totalorder %s428, 0
      %s431 = sadd.s32 %s430, 1
      %s432 = scalar_select %p429, %s430, %s431
      %p435 = pneg %p429
      %p436 = scmp.eq.s32.totalorder %s33, 3
      %p437 = por %p435, %p436
      %p438 = scmp.ne.s32.totalorder %s430, %s433
      %p439 = scmp.eq.s32.totalorder %s33, 0
      %p440 = por %p438, %p439
      %p441 = scmp.ne.s32.totalorder %s430, %s433
      %p442 = scmp.eq.s32.totalorder %s38, 3
      %p443 = por %p441, %p442
      %p444 = scmp.ne.s32.totalorder %s433, %s434
      %p445 = scmp.eq.s32.totalorder %s38, 0
      %p446 = por %p444, %p445
      %p447 = scmp.ne.s32.totalorder %s433, %s434
      %p448 = scmp.eq.s32.totalorder %s39, 3
      %p449 = por %p447, %p448
      %p451 = scmp.ne.s32.totalorder %s434, %s450
      %p452 = scmp.eq.s32.totalorder %s39, 0
      %p453 = por %p451, %p452
      %s454 = ssub.s32 %s41, %s48
      %p455 = scmp.eq.s32.totalorder %s454, 0
      %s457 = sadd.s32 %s456, 1
      %s458 = scalar_select %p455, %s456, %s457
      %p461 = pneg %p455
      %p462 = scmp.eq.s32.totalorder %s33, 3
      %p463 = por %p461, %p462
      %p464 = scmp.ne.s32.totalorder %s456, %s459
      %p465 = scmp.eq.s32.totalorder %s33, 0
      %p466 = por %p464, %p465
      %p467 = scmp.ne.s32.totalorder %s456, %s459
      %p468 = scmp.eq.s32.totalorder %s38, 3
      %p469 = por %p467, %p468
      %p470 = scmp.ne.s32.totalorder %s459, %s460
      %p471 = scmp.eq.s32.totalorder %s38, 0
      %p472 = por %p470, %p471
      %p473 = scmp.ne.s32.totalorder %s459, %s460
      %p474 = scmp.eq.s32.totalorder %s39, 3
      %p475 = por %p473, %p474
      %p477 = scmp.ne.s32.totalorder %s460, %s476
      %p478 = scmp.eq.s32.totalorder %s39, 0
      %p479 = por %p477, %p478
      %s480 = ssub.s32 %s41, %s48
      %p481 = scmp.eq.s32.totalorder %s480, 0
      %s483 = sadd.s32 %s482, 1
      %s484 = scalar_select %p481, %s482, %s483
      %p487 = pneg %p481
      %p488 = scmp.eq.s32.totalorder %s33, 3
      %p489 = por %p487, %p488
      %p490 = scmp.ne.s32.totalorder %s482, %s485
      %p491 = scmp.eq.s32.totalorder %s33, 0
      %p492 = por %p490, %p491
      %p493 = scmp.ne.s32.totalorder %s482, %s485
      %p494 = scmp.eq.s32.totalorder %s38, 3
      %p495 = por %p493, %p494
      %p496 = scmp.ne.s32.totalorder %s485, %s486
      %p497 = scmp.eq.s32.totalorder %s38, 0
      %p498 = por %p496, %p497
      %p499 = scmp.ne.s32.totalorder %s485, %s486
      %p500 = scmp.eq.s32.totalorder %s39, 3
      %p501 = por %p499, %p500
      %p503 = scmp.ne.s32.totalorder %s486, %s502
      %p504 = scmp.eq.s32.totalorder %s39, 0
      %p505 = por %p503, %p504
      %s506 = ssub.s32 %s41, %s48
      %p507 = scmp.eq.s32.totalorder %s506, 0
      %s509 = sadd.s32 %s508, 1
      %s510 = scalar_select %p507, %s508, %s509
      %p513 = pneg %p507
      %p514 = scmp.eq.s32.totalorder %s33, 3
      %p515 = por %p513, %p514
      %p516 = scmp.ne.s32.totalorder %s508, %s511
      %p517 = scmp.eq.s32.totalorder %s33, 0
      %p518 = por %p516, %p517
      %p519 = scmp.ne.s32.totalorder %s508, %s511
      %p520 = scmp.eq.s32.totalorder %s38, 3
      %p521 = por %p519, %p520
      %p522 = scmp.ne.s32.totalorder %s511, %s512
      %p523 = scmp.eq.s32.totalorder %s38, 0
      %p524 = por %p522, %p523
      %p525 = scmp.ne.s32.totalorder %s511, %s512
      %p526 = scmp.eq.s32.totalorder %s39, 3
      %p527 = por %p525, %p526
      %p529 = scmp.ne.s32.totalorder %s512, %s528
      %p530 = scmp.eq.s32.totalorder %s39, 0
      %p531 = por %p529, %p530
      %s532 = ssub.s32 %s41, %s48
      %p533 = scmp.eq.s32.totalorder %s532, 0
      %s535 = sadd.s32 %s534, 1
      %s536 = scalar_select %p533, %s534, %s535
      %p539 = pneg %p533
      %p540 = scmp.eq.s32.totalorder %s33, 3
      %p541 = por %p539, %p540
      %p542 = scmp.ne.s32.totalorder %s534, %s537
      %p543 = scmp.eq.s32.totalorder %s33, 0
      %p544 = por %p542, %p543
      %p545 = scmp.ne.s32.totalorder %s534, %s537
      %p546 = scmp.eq.s32.totalorder %s38, 3
      %p547 = por %p545, %p546
      %p548 = scmp.ne.s32.totalorder %s537, %s538
      %p549 = scmp.eq.s32.totalorder %s38, 0
      %p550 = por %p548, %p549
      %p551 = scmp.ne.s32.totalorder %s537, %s538
      %p552 = scmp.eq.s32.totalorder %s39, 3
      %p553 = por %p551, %p552
      %p555 = scmp.ne.s32.totalorder %s538, %s554
      %p556 = scmp.eq.s32.totalorder %s39, 0
      %p557 = por %p555, %p556
      %s558 = ssub.s32 %s41, %s48
      %p559 = scmp.eq.s32.totalorder %s558, 0
      %s561 = sadd.s32 %s560, 1
      %s562 = scalar_select %p559, %s560, %s561
      %p565 = pneg %p559
      %p566 = scmp.eq.s32.totalorder %s33, 3
      %p567 = por %p565, %p566
      %p568 = scmp.ne.s32.totalorder %s560, %s563
      %p569 = scmp.eq.s32.totalorder %s33, 0
      %p570 = por %p568, %p569
      %p571 = scmp.ne.s32.totalorder %s560, %s563
      %p572 = scmp.eq.s32.totalorder %s38, 3
      %p573 = por %p571, %p572
      %p574 = scmp.ne.s32.totalorder %s563, %s564
      %p575 = scmp.eq.s32.totalorder %s38, 0
      %p576 = por %p574, %p575
      %p577 = scmp.ne.s32.totalorder %s563, %s564
      %p578 = scmp.eq.s32.totalorder %s39, 3
      %p579 = por %p577, %p578
      %p581 = scmp.ne.s32.totalorder %s564, %s580
      %p582 = scmp.eq.s32.totalorder %s39, 0
      %p583 = por %p581, %p582
      %s584 = ssub.s32 %s41, %s48
      %p585 = scmp.eq.s32.totalorder %s584, 0
      %s587 = sadd.s32 %s586, 1
      %s588 = scalar_select %p585, %s586, %s587
      %p591 = pneg %p585
      %p592 = scmp.eq.s32.totalorder %s33, 3
      %p593 = por %p591, %p592
      %p594 = scmp.ne.s32.totalorder %s586, %s589
      %p595 = scmp.eq.s32.totalorder %s33, 0
      %p596 = por %p594, %p595
      %p597 = scmp.ne.s32.totalorder %s586, %s589
      %p598 = scmp.eq.s32.totalorder %s38, 3
      %p599 = por %p597, %p598
      %p600 = scmp.ne.s32.totalorder %s589, %s590
      %p601 = scmp.eq.s32.totalorder %s38, 0
      %p602 = por %p600, %p601
      %p603 = scmp.ne.s32.totalorder %s589, %s590
      %p604 = scmp.eq.s32.totalorder %s39, 3
      %p605 = por %p603, %p604
      %p607 = scmp.ne.s32.totalorder %s590, %s606
      %p608 = scmp.eq.s32.totalorder %s39, 0
      %p609 = por %p607, %p608
      %s610 = ssub.s32 %s40, %s52
      %p611 = scmp.eq.s32.totalorder %s610, 0
      %s613 = sadd.s32 %s612, 1
      %s614 = scalar_select %p611, %s612, %s613
      %p617 = pneg %p611
      %p618 = scmp.eq.s32.totalorder %s33, 3
      %p619 = por %p617, %p618
      %p620 = scmp.ne.s32.totalorder %s612, %s615
      %p621 = scmp.eq.s32.totalorder %s33, 0
      %p622 = por %p620, %p621
      %p623 = scmp.ne.s32.totalorder %s612, %s615
      %p624 = scmp.eq.s32.totalorder %s38, 3
      %p625 = por %p623, %p624
      %p626 = scmp.ne.s32.totalorder %s615, %s616
      %p627 = scmp.eq.s32.totalorder %s38, 0
      %p628 = por %p626, %p627
      %p629 = scmp.ne.s32.totalorder %s615, %s616
      %p630 = scmp.eq.s32.totalorder %s39, 3
      %p631 = por %p629, %p630
      %p633 = scmp.ne.s32.totalorder %s616, %s632
      %p634 = scmp.eq.s32.totalorder %s39, 0
      %p635 = por %p633, %p634
      %p636 = scmp.le.s32.totalorder 1, %s33
      %p637 = scmp.lt.s32.totalorder %s33, 5
      %p638 = pnand %p636, %p637
      %p639 = pneg %p638
      // Predicated region
      $region9: #{transformer_decoder_forward.1} parent=5 // pred_check
        _
      $region10: #{transformer_decoder_forward.1} parent=5 // pred_check_branch
        %641 = sbr.rel (%p638) target = $region12
      $region11: #{transformer_decoder_forward.1} parent=5 // pred_region
        %s642 = ssub.s32 %s33, 1
        // Predicated region
        $region13: #{transformer_decoder_forward.1} parent=11 // pred_check
          %p643 = pneg %p92
        $region14: #{transformer_decoder_forward.1} parent=11 // pred_check_branch
          %645 = sbr.rel (%p643) target = $region16
        $region15: #{transformer_decoder_forward.1} parent=11 // pred_region
          _
        $region16: #{transformer_decoder_forward.1} parent=11 // pred_fallthru
          _
        // Predicated region
        $region17: #{transformer_decoder_forward.1} parent=11 // pred_check
          %p646 = pneg %p139
        $region18: #{transformer_decoder_forward.1} parent=11 // pred_check_branch
          %648 = sbr.rel (%p646) target = $region20
        $region19: #{transformer_decoder_forward.1} parent=11 // pred_region
          %650 = vsyncadd [#allocation3], 0
          %s651 = sshll.u32 %s3, 4
          %s652 = int_to_ptr.hbm [resolvable:$true] %s651
          %s653 = sshll.u32 [#allocation2], 4
          %s654 = int_to_ptr.vmem [resolvable:$true] %s653
          %659 = dma.hbm_to_vmem [thread:$0]  %s652, 128, %s654, [#allocation3], 64, 64, 4
        $region20: #{transformer_decoder_forward.1} parent=11 // pred_fallthru
          _
        // Predicated region
        $region21: #{transformer_decoder_forward.1} parent=11 // pred_check
          %p660 = pneg %p160
        $region22: #{transformer_decoder_forward.1} parent=11 // pred_check_branch
          %662 = sbr.rel (%p660) target = $region24
        $region23: #{transformer_decoder_forward.1} parent=11 // pred_region
          %664 = vsyncadd [#allocation6], 0
          %s666 = sshll.u32 %s4, 4
          %s667 = int_to_ptr.hbm [resolvable:$true] %s666
          %s668 = sshll.u32 [#allocation5], 4
          %s669 = int_to_ptr.vmem [resolvable:$true] %s668
          %671 = dma.hbm_to_vmem [thread:$0]  %s667, 16, %s669, [#allocation6]
        $region24: #{transformer_decoder_forward.1} parent=11 // pred_fallthru
          _
      $region12: #{transformer_decoder_forward.1} parent=5 // pred_fallthru
        _
      %p672 = scmp.lt.s32.totalorder %s33, 4
      // Predicated region
      $region25: #{transformer_decoder_forward.1} parent=5 // pred_check
        %p673 = pneg %p672
      $region26: #{transformer_decoder_forward.1} parent=5 // pred_check_branch
        %675 = sbr.rel (%p673) target = $region28
      $region27: #{transformer_decoder_forward.1} parent=5 // pred_region
        // Predicated region
        $region29: #{transformer_decoder_forward.1} parent=27 // pred_check
          %p676 = pneg %p65
        $region30: #{transformer_decoder_forward.1} parent=27 // pred_check_branch
          %678 = sbr.rel (%p676) target = $region32
        $region31: #{transformer_decoder_forward.1} parent=27 // pred_region
          %p679 = scmp.lt.s32.totalorder %s40, 1
          %s680 = scalar_select %p679, %s40, 1
          %s681 = smul.addr %s680, 8
          %s682 = scalar_lea.vmem %s0, %s681
        $region32: #{transformer_decoder_forward.1} parent=27 // pred_fallthru
          _
        // Predicated region
        $region33: #{transformer_decoder_forward.1} parent=27 // pred_check
          %p683 = pneg %p112
        $region34: #{transformer_decoder_forward.1} parent=27 // pred_check_branch
          %685 = sbr.rel (%p683) target = $region36
        $region35: #{transformer_decoder_forward.1} parent=27 // pred_region
          %p686 = scmp.lt.s32.totalorder %s40, 1
          %s687 = scalar_select %p686, %s40, 1
          %s688 = smul.addr %s687, 8
          %s689 = scalar_lea.vmem %s2, %s688
        $region36: #{transformer_decoder_forward.1} parent=27 // pred_fallthru
          _
        // Predicated region
        $region37: #{transformer_decoder_forward.1} parent=27 // pred_check
          %p690 = pneg %p180
        $region38: #{transformer_decoder_forward.1} parent=27 // pred_check_branch
          %692 = sbr.rel (%p690) target = $region40
        $region39: #{transformer_decoder_forward.1} parent=27 // pred_region
          %p693 = scmp.lt.s32.totalorder %s41, 1
          %s694 = scalar_select %p693, %s41, 1
          %s695 = scalar_lea.vmem %s5, %s694
        $region40: #{transformer_decoder_forward.1} parent=27 // pred_fallthru
          _
        // Predicated region
        $region41: #{transformer_decoder_forward.1} parent=27 // pred_check
          %p696 = pneg %p206
        $region42: #{transformer_decoder_forward.1} parent=27 // pred_check_branch
          %698 = sbr.rel (%p696) target = $region44
        $region43: #{transformer_decoder_forward.1} parent=27 // pred_region
          %p699 = scmp.lt.s32.totalorder %s41, 1
          %s700 = scalar_select %p699, %s41, 1
          %s701 = scalar_lea.vmem %s6, %s700
        $region44: #{transformer_decoder_forward.1} parent=27 // pred_fallthru
          _
        // Predicated region
        $region45: #{transformer_decoder_forward.1} parent=27 // pred_check
          %p702 = pneg %p232
        $region46: #{transformer_decoder_forward.1} parent=27 // pred_check_branch
          %704 = sbr.rel (%p702) target = $region48
        $region47: #{transformer_decoder_forward.1} parent=27 // pred_region
          %p705 = scmp.lt.s32.totalorder %s41, 1
          %s706 = scalar_select %p705, %s41, 1
          %s707 = smul.addr %s706, 4
          %s708 = smul.addr %s707, 4
          %s709 = scalar_lea.vmem %s7, %s708
        $region48: #{transformer_decoder_forward.1} parent=27 // pred_fallthru
          _
        // Predicated region
        $region49: #{transformer_decoder_forward.1} parent=27 // pred_check
          %p710 = pneg %p258
        $region50: #{transformer_decoder_forward.1} parent=27 // pred_check_branch
          %712 = sbr.rel (%p710) target = $region52
        $region51: #{transformer_decoder_forward.1} parent=27 // pred_region
          %p713 = scmp.lt.s32.totalorder %s41, 1
          %s714 = scalar_select %p713, %s41, 1
          %s715 = smul.addr %s714, 2
          %s716 = smul.addr %s715, 4
          %s717 = scalar_lea.vmem %s8, %s716
        $region52: #{transformer_decoder_forward.1} parent=27 // pred_fallthru
          _
        // Predicated region
        $region53: #{transformer_decoder_forward.1} parent=27 // pred_check
          %p718 = pneg %p284
        $region54: #{transformer_decoder_forward.1} parent=27 // pred_check_branch
          %720 = sbr.rel (%p718) target = $region56
        $region55: #{transformer_decoder_forward.1} parent=27 // pred_region
          %s721 = sand.u32 %s33, 1
          %s722 = scalar_lea.sflag [#allocation3], %s721
          %s723 = sand.u32 %s274, 1
          %s724 = scalar_lea.vmem [#allocation7], %s723
          %726 = vsyncadd %s722, 0
          %s727 = scalar_lea.hbm %s9, %s41
          %s729 = sshll.u32 %s727, 4
          %s730 = int_to_ptr.hbm [resolvable:$true] %s729
          %s731 = sshll.u32 %s724, 4
          %s732 = int_to_ptr.vmem [resolvable:$true] %s731
          %734 = dma.hbm_to_vmem [thread:$0]  %s730, 16, %s732, %s722
        $region56: #{transformer_decoder_forward.1} parent=27 // pred_fallthru
          _
        // Predicated region
        $region57: #{transformer_decoder_forward.1} parent=27 // pred_check
          %p735 = pneg %p310
        $region58: #{transformer_decoder_forward.1} parent=27 // pred_check_branch
          %737 = sbr.rel (%p735) target = $region60
        $region59: #{transformer_decoder_forward.1} parent=27 // pred_region
          %s738 = sand.u32 %s33, 1
          %s739 = scalar_lea.sflag [#allocation3], %s738
          %s740 = sand.u32 %s300, 1
          %s741 = scalar_lea.vmem [#allocation8], %s740
          %743 = vsyncadd %s739, 0
          %s744 = scalar_lea.hbm %s10, %s41
          %s746 = sshll.u32 %s744, 4
          %s747 = int_to_ptr.hbm [resolvable:$true] %s746
          %s748 = sshll.u32 %s741, 4
          %s749 = int_to_ptr.vmem [resolvable:$true] %s748
          %751 = dma.hbm_to_vmem [thread:$0]  %s747, 16, %s749, %s739
        $region60: #{transformer_decoder_forward.1} parent=27 // pred_fallthru
          _
        // Predicated region
        $region61: #{transformer_decoder_forward.1} parent=27 // pred_check
          %p752 = pneg %p336
        $region62: #{transformer_decoder_forward.1} parent=27 // pred_check_branch
          %754 = sbr.rel (%p752) target = $region64
        $region63: #{transformer_decoder_forward.1} parent=27 // pred_region
          %s755 = sand.u32 %s33, 1
          %s756 = scalar_lea.sflag [#allocation3], %s755
          %s757 = sand.u32 %s326, 1
          %s758 = scalar_lea.vmem [#allocation9], %s757
          %760 = vsyncadd %s756, 0
          %s761 = scalar_lea.hbm %s11, %s41
          %s763 = sshll.u32 %s761, 4
          %s764 = int_to_ptr.hbm [resolvable:$true] %s763
          %s765 = sshll.u32 %s758, 4
          %s766 = int_to_ptr.vmem [resolvable:$true] %s765
          %768 = dma.hbm_to_vmem [thread:$0]  %s764, 16, %s766, %s756
        $region64: #{transformer_decoder_forward.1} parent=27 // pred_fallthru
          _
        // Predicated region
        $region65: #{transformer_decoder_forward.1} parent=27 // pred_check
          %p769 = pneg %p362
        $region66: #{transformer_decoder_forward.1} parent=27 // pred_check_branch
          %771 = sbr.rel (%p769) target = $region68
        $region67: #{transformer_decoder_forward.1} parent=27 // pred_region
          %p772 = scmp.lt.s32.totalorder %s41, 1
          %s773 = scalar_select %p772, %s41, 1
          %s774 = smul.addr %s773, 4
          %s775 = smul.addr %s774, 4
          %s776 = scalar_lea.vmem %s12, %s775
        $region68: #{transformer_decoder_forward.1} parent=27 // pred_fallthru
          _
        // Predicated region
        $region69: #{transformer_decoder_forward.1} parent=27 // pred_check
          %p777 = pneg %p388
        $region70: #{transformer_decoder_forward.1} parent=27 // pred_check_branch
          %779 = sbr.rel (%p777) target = $region72
        $region71: #{transformer_decoder_forward.1} parent=27 // pred_region
          %p780 = scmp.lt.s32.totalorder %s41, 1
          %s781 = scalar_select %p780, %s41, 1
          %s782 = smul.addr %s781, 3
          %s783 = smul.addr %s782, 4
          %s784 = scalar_lea.vmem %s13, %s783
        $region72: #{transformer_decoder_forward.1} parent=27 // pred_fallthru
          _
        // Predicated region
        $region73: #{transformer_decoder_forward.1} parent=27 // pred_check
          %p785 = pneg %p414
        $region74: #{transformer_decoder_forward.1} parent=27 // pred_check_branch
          %787 = sbr.rel (%p785) target = $region76
        $region75: #{transformer_decoder_forward.1} parent=27 // pred_region
          %s788 = sand.u32 %s33, 1
          %s789 = scalar_lea.sflag [#allocation3], %s788
          %s790 = sand.u32 %s404, 1
          %s791 = smul.addr %s790, 8
          %s792 = scalar_lea.vmem [#allocation10], %s791
          %794 = vsyncadd %s789, 0
          %s795 = smul.addr %s41, 2
          %s796 = smul.addr %s795, 4
          %s797 = scalar_lea.hbm %s14, %s796
          %s798 = sshll.u32 %s797, 4
          %s799 = int_to_ptr.hbm [resolvable:$true] %s798
          %s800 = sshll.u32 %s792, 4
          %s801 = int_to_ptr.vmem [resolvable:$true] %s800
          %806 = dma.hbm_to_vmem [thread:$0]  %s799, 128, %s801, %s789, 64, 64, 4
        $region76: #{transformer_decoder_forward.1} parent=27 // pred_fallthru
          _
        // Predicated region
        $region77: #{transformer_decoder_forward.1} parent=27 // pred_check
          %p807 = pneg %p440
        $region78: #{transformer_decoder_forward.1} parent=27 // pred_check_branch
          %809 = sbr.rel (%p807) target = $region80
        $region79: #{transformer_decoder_forward.1} parent=27 // pred_region
          %s810 = sand.u32 %s33, 1
          %s811 = scalar_lea.sflag [#allocation3], %s810
          %s812 = sand.u32 %s430, 1
          %s813 = scalar_lea.vmem [#allocation11], %s812
          %815 = vsyncadd %s811, 0
          %s816 = scalar_lea.hbm %s15, %s41
          %s818 = sshll.u32 %s816, 4
          %s819 = int_to_ptr.hbm [resolvable:$true] %s818
          %s820 = sshll.u32 %s813, 4
          %s821 = int_to_ptr.vmem [resolvable:$true] %s820
          %823 = dma.hbm_to_vmem [thread:$0]  %s819, 16, %s821, %s811
        $region80: #{transformer_decoder_forward.1} parent=27 // pred_fallthru
          _
        // Predicated region
        $region81: #{transformer_decoder_forward.1} parent=27 // pred_check
          %p824 = pneg %p466
        $region82: #{transformer_decoder_forward.1} parent=27 // pred_check_branch
          %826 = sbr.rel (%p824) target = $region84
        $region83: #{transformer_decoder_forward.1} parent=27 // pred_region
          %s827 = sand.u32 %s33, 1
          %s828 = scalar_lea.sflag [#allocation3], %s827
          %s829 = sand.u32 %s456, 1
          %s830 = scalar_lea.vmem [#allocation12], %s829
          %832 = vsyncadd %s828, 0
          %s833 = scalar_lea.hbm %s16, %s41
          %s835 = sshll.u32 %s833, 4
          %s836 = int_to_ptr.hbm [resolvable:$true] %s835
          %s837 = sshll.u32 %s830, 4
          %s838 = int_to_ptr.vmem [resolvable:$true] %s837
          %840 = dma.hbm_to_vmem [thread:$0]  %s836, 16, %s838, %s828
        $region84: #{transformer_decoder_forward.1} parent=27 // pred_fallthru
          _
        // Predicated region
        $region85: #{transformer_decoder_forward.1} parent=27 // pred_check
          %p841 = pneg %p492
        $region86: #{transformer_decoder_forward.1} parent=27 // pred_check_branch
          %843 = sbr.rel (%p841) target = $region88
        $region87: #{transformer_decoder_forward.1} parent=27 // pred_region
          %s844 = sand.u32 %s33, 1
          %s845 = scalar_lea.sflag [#allocation3], %s844
          %s846 = sand.u32 %s482, 1
          %s847 = scalar_lea.vmem [#allocation13], %s846
          %849 = vsyncadd %s845, 0
          %s850 = scalar_lea.hbm %s17, %s41
          %s852 = sshll.u32 %s850, 4
          %s853 = int_to_ptr.hbm [resolvable:$true] %s852
          %s854 = sshll.u32 %s847, 4
          %s855 = int_to_ptr.vmem [resolvable:$true] %s854
          %857 = dma.hbm_to_vmem [thread:$0]  %s853, 16, %s855, %s845
        $region88: #{transformer_decoder_forward.1} parent=27 // pred_fallthru
          _
        // Predicated region
        $region89: #{transformer_decoder_forward.1} parent=27 // pred_check
          %p858 = pneg %p518
        $region90: #{transformer_decoder_forward.1} parent=27 // pred_check_branch
          %860 = sbr.rel (%p858) target = $region92
        $region91: #{transformer_decoder_forward.1} parent=27 // pred_region
          %p861 = scmp.lt.s32.totalorder %s41, 1
          %s862 = scalar_select %p861, %s41, 1
          %s863 = smul.addr %s862, 4
          %s864 = smul.addr %s863, 4
          %s865 = scalar_lea.vmem %s18, %s864
        $region92: #{transformer_decoder_forward.1} parent=27 // pred_fallthru
          _
        // Predicated region
        $region93: #{transformer_decoder_forward.1} parent=27 // pred_check
          %p866 = pneg %p544
        $region94: #{transformer_decoder_forward.1} parent=27 // pred_check_branch
          %868 = sbr.rel (%p866) target = $region96
        $region95: #{transformer_decoder_forward.1} parent=27 // pred_region
          %s869 = sand.u32 %s33, 1
          %s870 = scalar_lea.sflag [#allocation3], %s869
          %s871 = sand.u32 %s534, 1
          %s872 = scalar_lea.vmem [#allocation14], %s871
          %874 = vsyncadd %s870, 0
          %s875 = scalar_lea.hbm %s19, %s41
          %s877 = sshll.u32 %s875, 4
          %s878 = int_to_ptr.hbm [resolvable:$true] %s877
          %s879 = sshll.u32 %s872, 4
          %s880 = int_to_ptr.vmem [resolvable:$true] %s879
          %882 = dma.hbm_to_vmem [thread:$0]  %s878, 16, %s880, %s870
        $region96: #{transformer_decoder_forward.1} parent=27 // pred_fallthru
          _
        // Predicated region
        $region97: #{transformer_decoder_forward.1} parent=27 // pred_check
          %p883 = pneg %p570
        $region98: #{transformer_decoder_forward.1} parent=27 // pred_check_branch
          %885 = sbr.rel (%p883) target = $region100
        $region99: #{transformer_decoder_forward.1} parent=27 // pred_region
          %p886 = scmp.lt.s32.totalorder %s41, 1
          %s887 = scalar_select %p886, %s41, 1
          %s888 = smul.addr %s887, 8
          %s889 = smul.addr %s888, 4
          %s890 = scalar_lea.vmem %s20, %s889
        $region100: #{transformer_decoder_forward.1} parent=27 // pred_fallthru
          _
        // Predicated region
        $region101: #{transformer_decoder_forward.1} parent=27 // pred_check
          %p891 = pneg %p596
        $region102: #{transformer_decoder_forward.1} parent=27 // pred_check_branch
          %893 = sbr.rel (%p891) target = $region104
        $region103: #{transformer_decoder_forward.1} parent=27 // pred_region
          %s894 = sand.u32 %s33, 1
          %s895 = scalar_lea.sflag [#allocation3], %s894
          %s896 = sand.u32 %s586, 1
          %s897 = scalar_lea.vmem [#allocation15], %s896
          %899 = vsyncadd %s895, 0
          %s900 = scalar_lea.hbm %s21, %s41
          %s902 = sshll.u32 %s900, 4
          %s903 = int_to_ptr.hbm [resolvable:$true] %s902
          %s904 = sshll.u32 %s897, 4
          %s905 = int_to_ptr.vmem [resolvable:$true] %s904
          %907 = dma.hbm_to_vmem [thread:$0]  %s903, 16, %s905, %s895
        $region104: #{transformer_decoder_forward.1} parent=27 // pred_fallthru
          _
      $region28: #{transformer_decoder_forward.1} parent=5 // pred_fallthru
        _
      %p908 = scmp.le.s32.totalorder 1, %s33
      %p909 = scmp.lt.s32.totalorder %s33, 5
      %p910 = pnand %p908, %p909
      %p911 = pneg %p910
      // Predicated region
      $region105: #{transformer_decoder_forward.1} parent=5 // pred_check
        _
      $region106: #{transformer_decoder_forward.1} parent=5 // pred_check_branch
        %913 = sbr.rel (%p910) target = $region108
      $region107: #{transformer_decoder_forward.1} parent=5 // pred_region
        %s914 = ssub.s32 %s33, 1
        // Predicated region
        $region109: #{transformer_decoder_forward.1} parent=107 // pred_check
          %p915 = pneg %p139
        $region110: #{transformer_decoder_forward.1} parent=107 // pred_check_branch
          %917 = sbr.rel (%p915) target = $region112
        $region111: #{transformer_decoder_forward.1} parent=107 // pred_region
          %919 = dma.done [#allocation3], 128
        $region112: #{transformer_decoder_forward.1} parent=107 // pred_fallthru
          _
        // Predicated region
        $region113: #{transformer_decoder_forward.1} parent=107 // pred_check
          %p920 = pneg %p160
        $region114: #{transformer_decoder_forward.1} parent=107 // pred_check_branch
          %922 = sbr.rel (%p920) target = $region116
        $region115: #{transformer_decoder_forward.1} parent=107 // pred_region
          %924 = dma.done [#allocation6], 16
        $region116: #{transformer_decoder_forward.1} parent=107 // pred_fallthru
          _
        %s925 = sand.u32 %s38, 1
        %s926 = scalar_lea.sflag [#allocation3], %s925
        %s927 = sand.u32 %s277, 1
        %s928 = scalar_lea.vmem [#allocation7], %s927
        // Predicated region
        $region117: #{transformer_decoder_forward.1} parent=107 // pred_check
          %p929 = pneg %p290
        $region118: #{transformer_decoder_forward.1} parent=107 // pred_check_branch
          %931 = sbr.rel (%p929) target = $region120
        $region119: #{transformer_decoder_forward.1} parent=107 // pred_region
          %933 = dma.done %s926, 16
        $region120: #{transformer_decoder_forward.1} parent=107 // pred_fallthru
          _
        %s934 = sand.u32 %s38, 1
        %s935 = scalar_lea.sflag [#allocation3], %s934
        %s936 = sand.u32 %s303, 1
        %s937 = scalar_lea.vmem [#allocation8], %s936
        // Predicated region
        $region121: #{transformer_decoder_forward.1} parent=107 // pred_check
          %p938 = pneg %p316
        $region122: #{transformer_decoder_forward.1} parent=107 // pred_check_branch
          %940 = sbr.rel (%p938) target = $region124
        $region123: #{transformer_decoder_forward.1} parent=107 // pred_region
          %942 = dma.done %s935, 16
        $region124: #{transformer_decoder_forward.1} parent=107 // pred_fallthru
          _
        %s943 = sand.u32 %s38, 1
        %s944 = scalar_lea.sflag [#allocation3], %s943
        %s945 = sand.u32 %s329, 1
        %s946 = scalar_lea.vmem [#allocation9], %s945
        // Predicated region
        $region125: #{transformer_decoder_forward.1} parent=107 // pred_check
          %p947 = pneg %p342
        $region126: #{transformer_decoder_forward.1} parent=107 // pred_check_branch
          %949 = sbr.rel (%p947) target = $region128
        $region127: #{transformer_decoder_forward.1} parent=107 // pred_region
          %951 = dma.done %s944, 16
        $region128: #{transformer_decoder_forward.1} parent=107 // pred_fallthru
          _
        %s952 = sand.u32 %s38, 1
        %s953 = scalar_lea.sflag [#allocation3], %s952
        %s954 = sand.u32 %s407, 1
        %s955 = smul.addr %s954, 8
        %s956 = scalar_lea.vmem [#allocation10], %s955
        // Predicated region
        $region129: #{transformer_decoder_forward.1} parent=107 // pred_check
          %p957 = pneg %p420
        $region130: #{transformer_decoder_forward.1} parent=107 // pred_check_branch
          %959 = sbr.rel (%p957) target = $region132
        $region131: #{transformer_decoder_forward.1} parent=107 // pred_region
          %961 = dma.done %s953, 128
        $region132: #{transformer_decoder_forward.1} parent=107 // pred_fallthru
          _
        %s962 = sand.u32 %s38, 1
        %s963 = scalar_lea.sflag [#allocation3], %s962
        %s964 = sand.u32 %s433, 1
        %s965 = scalar_lea.vmem [#allocation11], %s964
        // Predicated region
        $region133: #{transformer_decoder_forward.1} parent=107 // pred_check
          %p966 = pneg %p446
        $region134: #{transformer_decoder_forward.1} parent=107 // pred_check_branch
          %968 = sbr.rel (%p966) target = $region136
        $region135: #{transformer_decoder_forward.1} parent=107 // pred_region
          %970 = dma.done %s963, 16
        $region136: #{transformer_decoder_forward.1} parent=107 // pred_fallthru
          _
        %s971 = sand.u32 %s38, 1
        %s972 = scalar_lea.sflag [#allocation3], %s971
        %s973 = sand.u32 %s459, 1
        %s974 = scalar_lea.vmem [#allocation12], %s973
        // Predicated region
        $region137: #{transformer_decoder_forward.1} parent=107 // pred_check
          %p975 = pneg %p472
        $region138: #{transformer_decoder_forward.1} parent=107 // pred_check_branch
          %977 = sbr.rel (%p975) target = $region140
        $region139: #{transformer_decoder_forward.1} parent=107 // pred_region
          %979 = dma.done %s972, 16
        $region140: #{transformer_decoder_forward.1} parent=107 // pred_fallthru
          _
        %s980 = sand.u32 %s38, 1
        %s981 = scalar_lea.sflag [#allocation3], %s980
        %s982 = sand.u32 %s485, 1
        %s983 = scalar_lea.vmem [#allocation13], %s982
        // Predicated region
        $region141: #{transformer_decoder_forward.1} parent=107 // pred_check
          %p984 = pneg %p498
        $region142: #{transformer_decoder_forward.1} parent=107 // pred_check_branch
          %986 = sbr.rel (%p984) target = $region144
        $region143: #{transformer_decoder_forward.1} parent=107 // pred_region
          %988 = dma.done %s981, 16
        $region144: #{transformer_decoder_forward.1} parent=107 // pred_fallthru
          _
        %s989 = sand.u32 %s38, 1
        %s990 = scalar_lea.sflag [#allocation3], %s989
        %s991 = sand.u32 %s537, 1
        %s992 = scalar_lea.vmem [#allocation14], %s991
        // Predicated region
        $region145: #{transformer_decoder_forward.1} parent=107 // pred_check
          %p993 = pneg %p550
        $region146: #{transformer_decoder_forward.1} parent=107 // pred_check_branch
          %995 = sbr.rel (%p993) target = $region148
        $region147: #{transformer_decoder_forward.1} parent=107 // pred_region
          %997 = dma.done %s990, 16
        $region148: #{transformer_decoder_forward.1} parent=107 // pred_fallthru
          _
        %s998 = sand.u32 %s38, 1
        %s999 = scalar_lea.sflag [#allocation3], %s998
        %s1000 = sand.u32 %s589, 1
        %s1001 = scalar_lea.vmem [#allocation15], %s1000
        // Predicated region
        $region149: #{transformer_decoder_forward.1} parent=107 // pred_check
          %p1002 = pneg %p602
        $region150: #{transformer_decoder_forward.1} parent=107 // pred_check_branch
          %1004 = sbr.rel (%p1002) target = $region152
        $region151: #{transformer_decoder_forward.1} parent=107 // pred_region
          %1006 = dma.done %s999, 16
        $region152: #{transformer_decoder_forward.1} parent=107 // pred_fallthru
          _
        %p1007 = scmp.lt.s32.totalorder %s42, 1
        %s1008 = scalar_select %p1007, %s42, 1
        %s1009 = smul.addr %s1008, 8
        %s1010 = scalar_lea.vmem %s0, %s1009
        %p1011 = pneg %p71
        %p1012 = pneg %p68
        %p1013 = pneg %p92
        %p1014 = pneg %p89
        %p1015 = scmp.lt.s32.totalorder %s42, 1
        %s1016 = scalar_select %p1015, %s42, 1
        %s1017 = smul.addr %s1016, 8
        %s1018 = scalar_lea.vmem %s2, %s1017
        %p1019 = pneg %p118
        %p1020 = pneg %p115
        %p1021 = pneg %p139
        %p1022 = pneg %p136
        %p1023 = pneg %p160
        %p1024 = pneg %p157
        %p1025 = scmp.lt.s32.totalorder %s43, 1
        %s1026 = scalar_select %p1025, %s43, 1
        %s1027 = scalar_lea.vmem %s5, %s1026
        %p1028 = pneg %p186
        %p1029 = pneg %p183
        %p1030 = scmp.lt.s32.totalorder %s43, 1
        %s1031 = scalar_select %p1030, %s43, 1
        %s1032 = scalar_lea.vmem %s6, %s1031
        %p1033 = pneg %p212
        %p1034 = pneg %p209
        %p1035 = scmp.lt.s32.totalorder %s43, 1
        %s1036 = scalar_select %p1035, %s43, 1
        %s1037 = smul.addr %s1036, 4
        %s1038 = smul.addr %s1037, 4
        %s1039 = scalar_lea.vmem %s7, %s1038
        %p1040 = pneg %p238
        %p1041 = pneg %p235
        %p1042 = scmp.lt.s32.totalorder %s43, 1
        %s1043 = scalar_select %p1042, %s43, 1
        %s1044 = smul.addr %s1043, 2
        %s1045 = smul.addr %s1044, 4
        %s1046 = scalar_lea.vmem %s8, %s1045
        %p1047 = pneg %p264
        %p1048 = pneg %p261
        %s1049 = sand.u32 %s38, 1
        %s1050 = scalar_lea.sflag [#allocation3], %s1049
        %s1051 = sand.u32 %s277, 1
        %s1052 = scalar_lea.vmem [#allocation7], %s1051
        %p1053 = pneg %p290
        %p1054 = pneg %p287
        %s1055 = sand.u32 %s38, 1
        %s1056 = scalar_lea.sflag [#allocation3], %s1055
        %s1057 = sand.u32 %s303, 1
        %s1058 = scalar_lea.vmem [#allocation8], %s1057
        %p1059 = pneg %p316
        %p1060 = pneg %p313
        %s1061 = sand.u32 %s38, 1
        %s1062 = scalar_lea.sflag [#allocation3], %s1061
        %s1063 = sand.u32 %s329, 1
        %s1064 = scalar_lea.vmem [#allocation9], %s1063
        %p1065 = pneg %p342
        %p1066 = pneg %p339
        %p1067 = scmp.lt.s32.totalorder %s43, 1
        %s1068 = scalar_select %p1067, %s43, 1
        %s1069 = smul.addr %s1068, 4
        %s1070 = smul.addr %s1069, 4
        %s1071 = scalar_lea.vmem %s12, %s1070
        %p1072 = pneg %p368
        %p1073 = pneg %p365
        %p1074 = scmp.lt.s32.totalorder %s43, 1
        %s1075 = scalar_select %p1074, %s43, 1
        %s1076 = smul.addr %s1075, 3
        %s1077 = smul.addr %s1076, 4
        %s1078 = scalar_lea.vmem %s13, %s1077
        %p1079 = pneg %p394
        %p1080 = pneg %p391
        %s1081 = sand.u32 %s38, 1
        %s1082 = scalar_lea.sflag [#allocation3], %s1081
        %s1083 = sand.u32 %s407, 1
        %s1084 = smul.addr %s1083, 8
        %s1085 = scalar_lea.vmem [#allocation10], %s1084
        %p1086 = pneg %p420
        %p1087 = pneg %p417
        %s1088 = sand.u32 %s38, 1
        %s1089 = scalar_lea.sflag [#allocation3], %s1088
        %s1090 = sand.u32 %s433, 1
        %s1091 = scalar_lea.vmem [#allocation11], %s1090
        %p1092 = pneg %p446
        %p1093 = pneg %p443
        %s1094 = sand.u32 %s38, 1
        %s1095 = scalar_lea.sflag [#allocation3], %s1094
        %s1096 = sand.u32 %s459, 1
        %s1097 = scalar_lea.vmem [#allocation12], %s1096
        %p1098 = pneg %p472
        %p1099 = pneg %p469
        %s1100 = sand.u32 %s38, 1
        %s1101 = scalar_lea.sflag [#allocation3], %s1100
        %s1102 = sand.u32 %s485, 1
        %s1103 = scalar_lea.vmem [#allocation13], %s1102
        %p1104 = pneg %p498
        %p1105 = pneg %p495
        %p1106 = scmp.lt.s32.totalorder %s43, 1
        %s1107 = scalar_select %p1106, %s43, 1
        %s1108 = smul.addr %s1107, 4
        %s1109 = smul.addr %s1108, 4
        %s1110 = scalar_lea.vmem %s18, %s1109
        %p1111 = pneg %p524
        %p1112 = pneg %p521
        %s1113 = sand.u32 %s38, 1
        %s1114 = scalar_lea.sflag [#allocation3], %s1113
        %s1115 = sand.u32 %s537, 1
        %s1116 = scalar_lea.vmem [#allocation14], %s1115
        %p1117 = pneg %p550
        %p1118 = pneg %p547
        %p1119 = scmp.lt.s32.totalorder %s43, 1
        %s1120 = scalar_select %p1119, %s43, 1
        %s1121 = smul.addr %s1120, 8
        %s1122 = smul.addr %s1121, 4
        %s1123 = scalar_lea.vmem %s20, %s1122
        %p1124 = pneg %p576
        %p1125 = pneg %p573
        %s1126 = sand.u32 %s38, 1
        %s1127 = scalar_lea.sflag [#allocation3], %s1126
        %s1128 = sand.u32 %s589, 1
        %s1129 = scalar_lea.vmem [#allocation15], %s1128
        %p1130 = pneg %p602
        %p1131 = pneg %p599
        %p1132 = pneg %p628
        %p1133 = pneg %p625
        %s1134 = sand.u32 %s615, 1
        %s1135 = scalar_lea.sflag [#allocation4], %s1134
        %s1136 = sand.u32 %s615, 1
        %s1137 = smul.addr %s1136, 8
        %s1138 = scalar_lea.vmem [#allocation16], %s1137
        %p1139 = scmp.lt.s32.totalorder %s42, 1
        %s1140 = scalar_select %p1139, %s42, 1
        %s1141 = smul.addr %s1140, 8
        %s1142 = scalar_lea.vmem %s0, %s1141
        %p1143 = scmp.lt.s32.totalorder %s42, 1
        %s1144 = scalar_select %p1143, %s42, 1
        %s1145 = smul.addr %s1144, 8
        %s1146 = scalar_lea.vmem %s2, %s1145
        %p1147 = scmp.lt.s32.totalorder %s43, 1
        %s1148 = scalar_select %p1147, %s43, 1
        %s1149 = scalar_lea.vmem %s5, %s1148
        %p1150 = scmp.lt.s32.totalorder %s43, 1
        %s1151 = scalar_select %p1150, %s43, 1
        %s1152 = scalar_lea.vmem %s6, %s1151
        %p1153 = scmp.lt.s32.totalorder %s43, 1
        %s1154 = scalar_select %p1153, %s43, 1
        %s1155 = smul.addr %s1154, 4
        %s1156 = smul.addr %s1155, 4
        %s1157 = scalar_lea.vmem %s7, %s1156
        %p1158 = scmp.lt.s32.totalorder %s43, 1
        %s1159 = scalar_select %p1158, %s43, 1
        %s1160 = smul.addr %s1159, 2
        %s1161 = smul.addr %s1160, 4
        %s1162 = scalar_lea.vmem %s8, %s1161
        %p1163 = scmp.lt.s32.totalorder %s43, 1
        %s1164 = scalar_select %p1163, %s43, 1
        %s1165 = smul.addr %s1164, 4
        %s1166 = smul.addr %s1165, 4
        %s1167 = scalar_lea.vmem %s12, %s1166
        %p1168 = scmp.lt.s32.totalorder %s43, 1
        %s1169 = scalar_select %p1168, %s43, 1
        %s1170 = smul.addr %s1169, 3
        %s1171 = smul.addr %s1170, 4
        %s1172 = scalar_lea.vmem %s13, %s1171
        %p1173 = scmp.lt.s32.totalorder %s43, 1
        %s1174 = scalar_select %p1173, %s43, 1
        %s1175 = smul.addr %s1174, 4
        %s1176 = smul.addr %s1175, 4
        %s1177 = scalar_lea.vmem %s18, %s1176
        %p1178 = scmp.lt.s32.totalorder %s43, 1
        %s1179 = scalar_select %p1178, %s43, 1
        %s1180 = smul.addr %s1179, 8
        %s1181 = smul.addr %s1180, 4
        %s1182 = scalar_lea.vmem %s20, %s1181
        %p1184 = scmp.eq.s32.totalorder %s43, 0
        // Predicated region
        $region153: #{transformer_decoder_forward.1} parent=107 // pred_check
          %p1185 = pneg %p1184
        $region154: #{transformer_decoder_forward.1} parent=107 // pred_check_branch
          %1187 = sbr.rel (%p1185) target = $region156
        $region155: #{transformer_decoder_forward.1} parent=107 // pred_region
          %v1188 = vld [vmem:[%s1142] sm:$0xff]
          %v1189 = vpack.c.bf16 %v1188, %v1188
          %v1190 = vld [vmem:[#allocation2] sm:$0xf]
          %v1191 = vld [vmem:[#allocation2 + $0x4] sm:$0xf]
          %v1192 = vld [vmem:[#allocation5] sm:$0x1]
          %v1194 = vperm.slane %v1192, 0
          %v1198 = vunpack.c.l.b16 %v1190
          %v1199 = vunpack.c.l.b16 %v1191
          %v1200 = vpack.c.b16 %v1199, %v1198
          %vm1202 = vcmask 130048
          %v1204 = vsel %vm1202, %v1189, 0
          %1206 = vmatpush.bf16.msra.mxu0 0
          %1207 = vmatpush.bf16.msra.mxu0 0
          %1208 = vmatpush.bf16.msra.mxu0 0
          %1209 = vmatpush.bf16.msra.mxu0 0
          %1210 = vmatpush.bf16.msra.mxu0 0
          %1211 = vmatpush.bf16.msra.mxu0 0
          %1212 = vmatpush.bf16.msra.mxu0 0
          %1213 = vmatpush.bf16.msra.mxu0 %v1200
          %1214 = vmatmul.bf16.gmra.mxu0 %v1204
          %v1215 = vpop.f32.mrf.mxu0
          %v1216 = vadd.f32 %v1194, %v1215
          %v1217 = vpop.f32.mrf.mxu0
          %1218 = vdwg.mxu0
          %v1219 = vld [vmem:[%s1] sm:$0xff]
          %v1220 = vadd.f32 %v1216, %v1219
          %vm1221 = vcmask 261120
          %1222 = vst.msk [vmem:[%s1138] sm:$0xff] %vm1221, %v1220
        $region156: #{transformer_decoder_forward.1} parent=107 // pred_fallthru
          _
        %v1223 = vld [vmem:[%s1138] sm:$0xff]
        %v1224 = vld [vmem:[%s1146] sm:$0x3f]
        %vm1225 = vcmask 261120
        %v1226 = vsel %vm1225, %v1223, 0.0
        %1227 = vadd.xlane.f32.xlu0 %v1226
        %v1228 = vpop.xlane.xlu0 %1227
        %v1229 = vrcp.pop 32.0
        %v1230 = vmul.f32 32.0, %v1229
        %v1231 = vsub.f32 1.0, %v1230
        %v1232 = vmul.f32 %v1229, %v1231
        %v1233 = vadd.f32 %v1229, %v1232
        %vm1234 = vweird.f32 %v1229
        %v1235 = vsel %vm1234, %v1229, %v1233
        %v1236 = vmul.f32 %v1228, %v1235
        %v1237 = vsub.f32 %v1223, %v1236
        %v1238 = vmul.f32 %v1237, %v1237
        %v1239 = vsel %vm1225, %v1238, 0.0
        %1240 = vadd.xlane.f32.xlu0 %v1239
        %v1241 = vpop.xlane.xlu0 %1240
        %v1242 = vmul.f32 %v1241, %v1235
        %v1243 = vadd.f32 %v1242, 1e-05
        %v1244 = vrsqrt.pop %v1243
        %v1245 = vmul.f32 %v1244, %v1243
        %v1246 = vmul.f32 %v1245, %v1244
        %v1247 = vmul.f32 0.5, %v1246
        %v1248 = vsub.f32 1.5, %v1247
        %v1249 = vmul.f32 %v1244, %v1248
        %vm1250 = vweird.f32 %v1243
        %vm1251 = vweird.f32 %v1244
        %vm1252 = vmor %vm1250, %vm1251
        %v1253 = vsel %vm1252, %v1244, %v1249
        %v1254 = vmul.f32 %v1237, %v1253
        %v1255 = vld [vmem:[%s1149] sm:$0x1]
        %v1257 = vperm.slane %v1255, 0
        %v1259 = vmul.f32 %v1254, %v1257
        %v1260 = vld [vmem:[%s1152] sm:$0x1]
        %v1262 = vperm.slane %v1260, 0
        %v1264 = vadd.f32 %v1259, %v1262
        %v1265 = vpack.c.bf16 %v1264, %v1264
        %v1266 = vld [vmem:[%s1157] sm:$0xf]
        %v1267 = vld [vmem:[%s1157 + $0x4] sm:$0xf]
        %v1268 = vld [vmem:[%s1157 + $0x8] sm:$0xf]
        %v1269 = vld [vmem:[%s1157 + $0xc] sm:$0xf]
        %v1274 = vunpack.c.l.b16 %v1266
        %v1275 = vunpack.c.l.b16 %v1267
        %v1276 = vunpack.c.l.b16 %v1268
        %v1277 = vunpack.c.l.b16 %v1269
        %v1278 = vpack.c.b16 %v1275, %v1274
        %v1279 = vpack.c.b16 %v1277, %v1276
        %v1283 = vsel %vm1225, %v1265, 0
        %1285 = vmatpush.bf16.msra.mxu0 0
        %1286 = vmatpush.bf16.msra.mxu0 0
        %1287 = vmatpush.bf16.msra.mxu0 0
        %1288 = vmatpush.bf16.msra.mxu0 0
        %1289 = vmatpush.bf16.msra.mxu0 0
        %1290 = vmatpush.bf16.msra.mxu0 0
        %1291 = vmatpush.bf16.msra.mxu0 %v1279
        %1292 = vmatpush.bf16.msra.mxu0 %v1278
        %1293 = vmatmul.bf16.gmra.mxu0 %v1283
        %v1294 = vpop.f32.mrf.mxu0
        %v1295 = vadd.f32 0.0, %v1294
        %v1296 = vpop.f32.mrf.mxu0
        %1297 = vdwg.mxu0
        %v1298 = vmul.f32 %v1295, 0.35355338
        %v1299 = vpack.c.bf16 %v1298, %v1298
        %v1300 = vpack.c.bf16 %v1295, %v1295
        %1302 = vrot.lane.b32.xlu0 %v1300, 112
        %v1303 = vpop.permute.xlu0 %1302
        %vm1304 = vcmask 64512
        %v1306 = vsel %vm1304, %v1299, 0
        %v1309 = vsel %vm1304, %v1303, 0
        %1311 = vmatpush.bf16.xpose.msra.mxu0 0
        %1312 = vmatpush.bf16.xpose.msra.mxu0 0
        %1313 = vmatpush.bf16.xpose.msra.mxu0 0
        %1314 = vmatpush.bf16.xpose.msra.mxu0 0
        %1315 = vmatpush.bf16.xpose.msra.mxu0 0
        %1316 = vmatpush.bf16.xpose.msra.mxu0 0
        %1317 = vmatpush.bf16.xpose.msra.mxu0 0
        %1318 = vmatpush.bf16.xpose.msra.mxu0 %v1309
        %1319 = vmatmul.bf16.gmra.mxu0 %v1306
        %v1320 = vpop.f32.mrf.mxu0
        %v1321 = vadd.f32 0.0, %v1320
        %v1322 = vpop.f32.mrf.mxu0
        %1323 = vdwg.mxu0
        %v1324 = vsel %vm1304, %v1321, -inf
        %1325 = vmax.xlane.f32.xlu0 %v1324
        %v1326 = vpop.xlane.xlu0 %1325
        %v1327 = vsub.f32 %v1321, %v1326
        %v1328 = vmul.f32 %v1327, 1.442695
        %v1329 = vpow.pop %v1328
        %v1330 = vsel %vm1304, %v1329, 0.0
        %1331 = vadd.xlane.f32.xlu0 %v1330
        %v1332 = vpop.xlane.xlu0 %1331
        %v1333 = vrcp.pop %v1332
        %v1334 = vmul.f32 %v1329, %v1333
        %v1335 = vpack.c.bf16 %v1334, %v1334
        %1336 = vrot.lane.b32.xlu0 %v1300, 96
        %v1337 = vpop.permute.xlu0 %1336
        %v1339 = vsel %vm1304, %v1335, 0
        %vm1341 = vcmask 1043456
        %v1343 = vsel %vm1341, %v1337, 0
        %1345 = vmatpush.bf16.msra.mxu0 0
        %1346 = vmatpush.bf16.msra.mxu0 0
        %1347 = vmatpush.bf16.msra.mxu0 0
        %1348 = vmatpush.bf16.msra.mxu0 0
        %1349 = vmatpush.bf16.msra.mxu0 0
        %1350 = vmatpush.bf16.msra.mxu0 0
        %1351 = vmatpush.bf16.msra.mxu0 0
        %1352 = vmatpush.bf16.msra.mxu0 %v1343
        %1353 = vmatmul.bf16.gmra.mxu0 %v1339
        %v1354 = vpop.f32.mrf.mxu0
        %v1355 = vadd.f32 0.0, %v1354
        %v1356 = vpop.f32.mrf.mxu0
        %1357 = vdwg.mxu0
        %1359 = vrot.lane.b32.xlu0 %v1299, 120
        %v1360 = vpop.permute.xlu0 %1359
        %1361 = vrot.lane.b32.xlu0 %v1300, 104
        %v1362 = vpop.permute.xlu0 %1361
        %v1364 = vsel %vm1304, %v1360, 0
        %v1367 = vsel %vm1304, %v1362, 0
        %1369 = vmatpush.bf16.xpose.msra.mxu0 0
        %1370 = vmatpush.bf16.xpose.msra.mxu0 0
        %1371 = vmatpush.bf16.xpose.msra.mxu0 0
        %1372 = vmatpush.bf16.xpose.msra.mxu0 0
        %1373 = vmatpush.bf16.xpose.msra.mxu0 0
        %1374 = vmatpush.bf16.xpose.msra.mxu0 0
        %1375 = vmatpush.bf16.xpose.msra.mxu0 0
        %1376 = vmatpush.bf16.xpose.msra.mxu0 %v1367
        %1377 = vmatmul.bf16.gmra.mxu0 %v1364
        %v1378 = vpop.f32.mrf.mxu0
        %v1379 = vadd.f32 0.0, %v1378
        %v1380 = vpop.f32.mrf.mxu0
        %1381 = vdwg.mxu0
        %v1382 = vsel %vm1304, %v1379, -inf
        %1383 = vmax.xlane.f32.xlu0 %v1382
        %v1384 = vpop.xlane.xlu0 %1383
        %v1385 = vsub.f32 %v1379, %v1384
        %v1386 = vmul.f32 %v1385, 1.442695
        %v1387 = vpow.pop %v1386
        %v1388 = vsel %vm1304, %v1387, 0.0
        %1389 = vadd.xlane.f32.xlu0 %v1388
        %v1390 = vpop.xlane.xlu0 %1389
        %v1391 = vrcp.pop %v1390
        %v1392 = vmul.f32 %v1387, %v1391
        %v1393 = vpack.c.bf16 %v1392, %v1392
        %1394 = vrot.lane.b32.xlu0 %v1300, 88
        %v1395 = vpop.permute.xlu0 %1394
        %v1397 = vsel %vm1304, %v1393, 0
        %v1400 = vsel %vm1341, %v1395, 0
        %1402 = vmatpush.bf16.msra.mxu0 0
        %1403 = vmatpush.bf16.msra.mxu0 0
        %1404 = vmatpush.bf16.msra.mxu0 0
        %1405 = vmatpush.bf16.msra.mxu0 0
        %1406 = vmatpush.bf16.msra.mxu0 0
        %1407 = vmatpush.bf16.msra.mxu0 0
        %1408 = vmatpush.bf16.msra.mxu0 0
        %1409 = vmatpush.bf16.msra.mxu0 %v1400
        %1410 = vmatmul.bf16.gmra.mxu0 %v1397
        %v1411 = vpop.f32.mrf.mxu0
        %v1412 = vadd.f32 0.0, %v1411
        %v1413 = vpop.f32.mrf.mxu0
        %1414 = vdwg.mxu0
        %1416 = vrot.lane.b32.xlu0 %v1412, 8
        %v1417 = vpop.permute.xlu0 %1416
        %v1419 = vsel %vm1304, %v1355, %v1417
        %v1420 = vpack.c.bf16 %v1419, %v1419
        %v1421 = vld [vmem:[%s1162] sm:$0xf]
        %v1422 = vld [vmem:[%s1162 + $0x4] sm:$0xf]
        %v1425 = vunpack.c.l.b16 %v1421
        %v1426 = vunpack.c.l.b16 %v1422
        %v1427 = vpack.c.b16 %v1426, %v1425
        %vm1429 = vcmask 130048
        %v1431 = vsel %vm1429, %v1420, 0
        %1433 = vmatpush.bf16.msra.mxu0 0
        %1434 = vmatpush.bf16.msra.mxu0 0
        %1435 = vmatpush.bf16.msra.mxu0 0
        %1436 = vmatpush.bf16.msra.mxu0 0
        %1437 = vmatpush.bf16.msra.mxu0 0
        %1438 = vmatpush.bf16.msra.mxu0 0
        %1439 = vmatpush.bf16.msra.mxu0 0
        %1440 = vmatpush.bf16.msra.mxu0 %v1427
        %1441 = vmatmul.bf16.gmra.mxu0 %v1431
        %v1442 = vpop.f32.mrf.mxu0
        %v1443 = vadd.f32 0.0, %v1442
        %v1444 = vpop.f32.mrf.mxu0
        %1445 = vdwg.mxu0
        %v1446 = vadd.f32 %v1223, %v1443
        %v1447 = vld [vmem:[%s928] sm:$0x1]
        %v1449 = vperm.slane %v1447, 0
        %v1451 = vadd.f32 %v1446, %v1449
        %v1452 = vsel %vm1225, %v1451, 0.0
        %1453 = vadd.xlane.f32.xlu0 %v1452
        %v1454 = vpop.xlane.xlu0 %1453
        %v1455 = vmul.f32 %v1454, %v1235
        %v1456 = vsub.f32 %v1451, %v1455
        %v1457 = vmul.f32 %v1456, %v1456
        %v1458 = vsel %vm1225, %v1457, 0.0
        %1459 = vadd.xlane.f32.xlu0 %v1458
        %v1460 = vpop.xlane.xlu0 %1459
        %v1461 = vmul.f32 %v1460, %v1235
        %v1462 = vadd.f32 %v1461, 1e-05
        %v1463 = vrsqrt.pop %v1462
        %v1464 = vmul.f32 %v1463, %v1462
        %v1465 = vmul.f32 %v1464, %v1463
        %v1466 = vmul.f32 0.5, %v1465
        %v1467 = vsub.f32 1.5, %v1466
        %v1468 = vmul.f32 %v1463, %v1467
        %vm1469 = vweird.f32 %v1462
        %vm1470 = vweird.f32 %v1463
        %vm1471 = vmor %vm1469, %vm1470
        %v1472 = vsel %vm1471, %v1463, %v1468
        %v1473 = vmul.f32 %v1456, %v1472
        %v1474 = vld [vmem:[%s937] sm:$0x1]
        %v1476 = vperm.slane %v1474, 0
        %v1478 = vmul.f32 %v1473, %v1476
        %v1479 = vld [vmem:[%s946] sm:$0x1]
        %v1481 = vperm.slane %v1479, 0
        %v1483 = vadd.f32 %v1478, %v1481
        %v1484 = vpack.c.bf16 %v1483, %v1483
        %v1485 = vld [vmem:[%s1167] sm:$0xf]
        %v1486 = vld [vmem:[%s1167 + $0x4] sm:$0xf]
        %v1487 = vld [vmem:[%s1167 + $0x8] sm:$0xf]
        %v1488 = vld [vmem:[%s1167 + $0xc] sm:$0xf]
        %v1493 = vunpack.c.l.b16 %v1485
        %v1494 = vunpack.c.l.b16 %v1486
        %v1495 = vunpack.c.l.b16 %v1487
        %v1496 = vunpack.c.l.b16 %v1488
        %v1497 = vpack.c.b16 %v1494, %v1493
        %v1498 = vpack.c.b16 %v1496, %v1495
        %v1502 = vsel %vm1225, %v1484, 0
        %1504 = vmatpush.bf16.msra.mxu0 0
        %1505 = vmatpush.bf16.msra.mxu0 0
        %1506 = vmatpush.bf16.msra.mxu0 0
        %1507 = vmatpush.bf16.msra.mxu0 0
        %1508 = vmatpush.bf16.msra.mxu0 0
        %1509 = vmatpush.bf16.msra.mxu0 0
        %1510 = vmatpush.bf16.msra.mxu0 %v1498
        %1511 = vmatpush.bf16.msra.mxu0 %v1497
        %1512 = vmatmul.bf16.gmra.mxu0 %v1502
        %v1513 = vpop.f32.mrf.mxu0
        %v1514 = vadd.f32 0.0, %v1513
        %v1515 = vpop.f32.mrf.mxu0
        %1516 = vdwg.mxu0
        %v1517 = vpack.c.bf16 %v1224, %v1224
        %v1518 = vld [vmem:[%s1172] sm:$0xf]
        %v1519 = vld [vmem:[%s1172 + $0x4] sm:$0xf]
        %v1520 = vld [vmem:[%s1172 + $0x8] sm:$0xf]
        %v1524 = vunpack.c.l.b16 %v1518
        %v1525 = vunpack.c.l.b16 %v1519
        %v1526 = vunpack.c.l.b16 %v1520
        %v1527 = vpack.c.b16 %v1525, %v1524
        %v1528 = vpack.c.b16 %v1526, %v1526
        %vm1530 = vcmask 195584
        %v1532 = vsel %vm1530, %v1517, 0
        %v1535 = vsel %vm1341, %v1528, 0
        %1537 = vmatpush.bf16.msra.mxu0 0
        %1538 = vmatpush.bf16.msra.mxu0 0
        %1539 = vmatpush.bf16.msra.mxu0 0
        %1540 = vmatpush.bf16.msra.mxu0 0
        %1541 = vmatpush.bf16.msra.mxu0 0
        %1542 = vmatpush.bf16.msra.mxu0 0
        %1543 = vmatpush.bf16.msra.mxu0 %v1535
        %1544 = vmatpush.bf16.msra.mxu0 %v1527
        %1545 = vmatmul.bf16.gmra.mxu0 %v1532
        %v1546 = vpop.f32.mrf.mxu0
        %v1547 = vadd.f32 0.0, %v1546
        %v1548 = vpop.f32.mrf.mxu0
        %1549 = vdwg.mxu0
        %v1550 = vmul.f32 %v1514, 0.35355338
        %v1551 = vpack.c.bf16 %v1550, %v1550
        %v1552 = vpack.c.bf16 %v1547, %v1547
        %v1554 = vsel %vm1304, %v1551, 0
        %v1557 = vsel %vm1304, %v1552, 0
        %1559 = vmatpush.bf16.xpose.msra.mxu0 0
        %1560 = vmatpush.bf16.xpose.msra.mxu0 0
        %1561 = vmatpush.bf16.xpose.msra.mxu0 0
        %1562 = vmatpush.bf16.xpose.msra.mxu0 0
        %1563 = vmatpush.bf16.xpose.msra.mxu0 0
        %1564 = vmatpush.bf16.xpose.msra.mxu0 0
        %1565 = vmatpush.bf16.xpose.msra.mxu0 0
        %1566 = vmatpush.bf16.xpose.msra.mxu0 %v1557
        %1567 = vmatmul.bf16.gmra.mxu0 %v1554
        %v1568 = vpop.f32.mrf.mxu0
        %v1569 = vadd.f32 0.0, %v1568
        %v1570 = vpop.f32.mrf.mxu0
        %1571 = vdwg.mxu0
        %vm1572 = vcmask 48128
        %v1573 = vsel %vm1572, %v1569, -inf
        %1574 = vmax.xlane.f32.xlu0 %v1573
        %v1575 = vpop.xlane.xlu0 %1574
        %v1576 = vsub.f32 %v1569, %v1575
        %v1577 = vmul.f32 %v1576, 1.442695
        %v1578 = vpow.pop %v1577
        %v1579 = vsel %vm1572, %v1578, 0.0
        %1580 = vadd.xlane.f32.xlu0 %v1579
        %v1581 = vpop.xlane.xlu0 %1580
        %v1582 = vrcp.pop %v1581
        %v1583 = vmul.f32 %v1578, %v1582
        %v1584 = vpack.c.bf16 %v1583, %v1583
        %1586 = vrot.lane.b32.xlu0 %v1552, 112
        %v1587 = vpop.permute.xlu0 %1586
        %v1589 = vsel %vm1572, %v1584, 0
        %vm1591 = vcmask 1042432
        %v1593 = vsel %vm1591, %v1587, 0
        %1595 = vmatpush.bf16.msra.mxu0 0
        %1596 = vmatpush.bf16.msra.mxu0 0
        %1597 = vmatpush.bf16.msra.mxu0 0
        %1598 = vmatpush.bf16.msra.mxu0 0
        %1599 = vmatpush.bf16.msra.mxu0 0
        %1600 = vmatpush.bf16.msra.mxu0 0
        %1601 = vmatpush.bf16.msra.mxu0 0
        %1602 = vmatpush.bf16.msra.mxu0 %v1593
        %1603 = vmatmul.bf16.gmra.mxu0 %v1589
        %v1604 = vpop.f32.mrf.mxu0
        %v1605 = vadd.f32 0.0, %v1604
        %v1606 = vpop.f32.mrf.mxu0
        %1607 = vdwg.mxu0
        %1609 = vrot.lane.b32.xlu0 %v1551, 120
        %v1610 = vpop.permute.xlu0 %1609
        %1611 = vrot.lane.b32.xlu0 %v1552, 120
        %v1612 = vpop.permute.xlu0 %1611
        %v1614 = vsel %vm1304, %v1610, 0
        %v1617 = vsel %vm1304, %v1612, 0
        %1619 = vmatpush.bf16.xpose.msra.mxu0 0
        %1620 = vmatpush.bf16.xpose.msra.mxu0 0
        %1621 = vmatpush.bf16.xpose.msra.mxu0 0
        %1622 = vmatpush.bf16.xpose.msra.mxu0 0
        %1623 = vmatpush.bf16.xpose.msra.mxu0 0
        %1624 = vmatpush.bf16.xpose.msra.mxu0 0
        %1625 = vmatpush.bf16.xpose.msra.mxu0 0
        %1626 = vmatpush.bf16.xpose.msra.mxu0 %v1617
        %1627 = vmatmul.bf16.gmra.mxu0 %v1614
        %v1628 = vpop.f32.mrf.mxu0
        %v1629 = vadd.f32 0.0, %v1628
        %v1630 = vpop.f32.mrf.mxu0
        %1631 = vdwg.mxu0
        %v1632 = vsel %vm1572, %v1629, -inf
        %1633 = vmax.xlane.f32.xlu0 %v1632
        %v1634 = vpop.xlane.xlu0 %1633
        %v1635 = vsub.f32 %v1629, %v1634
        %v1636 = vmul.f32 %v1635, 1.442695
        %v1637 = vpow.pop %v1636
        %v1638 = vsel %vm1572, %v1637, 0.0
        %1639 = vadd.xlane.f32.xlu0 %v1638
        %v1640 = vpop.xlane.xlu0 %1639
        %v1641 = vrcp.pop %v1640
        %v1642 = vmul.f32 %v1637, %v1641
        %v1643 = vpack.c.bf16 %v1642, %v1642
        %1644 = vrot.lane.b32.xlu0 %v1552, 104
        %v1645 = vpop.permute.xlu0 %1644
        %v1647 = vsel %vm1572, %v1643, 0
        %v1650 = vsel %vm1591, %v1645, 0
        %1652 = vmatpush.bf16.msra.mxu0 0
        %1653 = vmatpush.bf16.msra.mxu0 0
        %1654 = vmatpush.bf16.msra.mxu0 0
        %1655 = vmatpush.bf16.msra.mxu0 0
        %1656 = vmatpush.bf16.msra.mxu0 0
        %1657 = vmatpush.bf16.msra.mxu0 0
        %1658 = vmatpush.bf16.msra.mxu0 0
        %1659 = vmatpush.bf16.msra.mxu0 %v1650
        %1660 = vmatmul.bf16.gmra.mxu0 %v1647
        %v1661 = vpop.f32.mrf.mxu0
        %v1662 = vadd.f32 0.0, %v1661
        %v1663 = vpop.f32.mrf.mxu0
        %1664 = vdwg.mxu0
        %1666 = vrot.lane.b32.xlu0 %v1662, 8
        %v1667 = vpop.permute.xlu0 %1666
        %v1669 = vsel %vm1304, %v1605, %v1667
        %v1670 = vpack.c.bf16 %v1669, %v1669
        %v1671 = vld [vmem:[%s956] sm:$0xf]
        %v1672 = vld [vmem:[%s956 + $0x4] sm:$0xf]
        %v1675 = vunpack.c.l.b16 %v1671
        %v1676 = vunpack.c.l.b16 %v1672
        %v1677 = vpack.c.b16 %v1676, %v1675
        %v1680 = vsel %vm1429, %v1670, 0
        %1682 = vmatpush.bf16.msra.mxu0 0
        %1683 = vmatpush.bf16.msra.mxu0 0
        %1684 = vmatpush.bf16.msra.mxu0 0
        %1685 = vmatpush.bf16.msra.mxu0 0
        %1686 = vmatpush.bf16.msra.mxu0 0
        %1687 = vmatpush.bf16.msra.mxu0 0
        %1688 = vmatpush.bf16.msra.mxu0 0
        %1689 = vmatpush.bf16.msra.mxu0 %v1677
        %1690 = vmatmul.bf16.gmra.mxu0 %v1680
        %v1691 = vpop.f32.mrf.mxu0
        %v1692 = vadd.f32 0.0, %v1691
        %v1693 = vpop.f32.mrf.mxu0
        %1694 = vdwg.mxu0
        %v1695 = vadd.f32 %v1451, %v1692
        %v1696 = vld [vmem:[%s965] sm:$0x1]
        %v1698 = vperm.slane %v1696, 0
        %v1700 = vadd.f32 %v1695, %v1698
        %v1701 = vsel %vm1225, %v1700, 0.0
        %1702 = vadd.xlane.f32.xlu0 %v1701
        %v1703 = vpop.xlane.xlu0 %1702
        %v1704 = vmul.f32 %v1703, %v1235
        %v1705 = vsub.f32 %v1700, %v1704
        %v1706 = vmul.f32 %v1705, %v1705
        %v1707 = vsel %vm1225, %v1706, 0.0
        %1708 = vadd.xlane.f32.xlu0 %v1707
        %v1709 = vpop.xlane.xlu0 %1708
        %v1710 = vmul.f32 %v1709, %v1235
        %v1711 = vadd.f32 %v1710, 1e-05
        %v1712 = vrsqrt.pop %v1711
        %v1713 = vmul.f32 %v1712, %v1711
        %v1714 = vmul.f32 %v1713, %v1712
        %v1715 = vmul.f32 0.5, %v1714
        %v1716 = vsub.f32 1.5, %v1715
        %v1717 = vmul.f32 %v1712, %v1716
        %vm1718 = vweird.f32 %v1711
        %vm1719 = vweird.f32 %v1712
        %vm1720 = vmor %vm1718, %vm1719
        %v1721 = vsel %vm1720, %v1712, %v1717
        %v1722 = vmul.f32 %v1705, %v1721
        %v1723 = vld [vmem:[%s974] sm:$0x1]
        %v1725 = vperm.slane %v1723, 0
        %v1727 = vmul.f32 %v1722, %v1725
        %v1728 = vld [vmem:[%s983] sm:$0x1]
        %v1730 = vperm.slane %v1728, 0
        %v1732 = vadd.f32 %v1727, %v1730
        %v1733 = vpack.c.bf16 %v1732, %v1732
        %v1734 = vld [vmem:[%s1177] sm:$0xf]
        %v1735 = vld [vmem:[%s1177 + $0x4] sm:$0xf]
        %v1736 = vld [vmem:[%s1177 + $0x8] sm:$0xf]
        %v1737 = vld [vmem:[%s1177 + $0xc] sm:$0xf]
        %v1738 = vld [vmem:[%s992] sm:$0x1]
        %v1740 = vperm.slane %v1738, 0
        %v1746 = vunpack.c.l.b16 %v1734
        %v1747 = vunpack.c.l.b16 %v1735
        %v1748 = vunpack.c.l.b16 %v1736
        %v1749 = vunpack.c.l.b16 %v1737
        %v1750 = vpack.c.b16 %v1747, %v1746
        %v1751 = vpack.c.b16 %v1749, %v1748
        %v1755 = vsel %vm1225, %v1733, 0
        %1757 = vmatpush.bf16.msra.mxu0 0
        %1758 = vmatpush.bf16.msra.mxu0 0
        %1759 = vmatpush.bf16.msra.mxu0 0
        %1760 = vmatpush.bf16.msra.mxu0 0
        %1761 = vmatpush.bf16.msra.mxu0 0
        %1762 = vmatpush.bf16.msra.mxu0 0
        %1763 = vmatpush.bf16.msra.mxu0 %v1751
        %1764 = vmatpush.bf16.msra.mxu0 %v1750
        %1765 = vmatmul.bf16.gmra.mxu0 %v1755
        %v1766 = vpop.f32.mrf.mxu0
        %v1767 = vadd.f32 %v1740, %v1766
        %v1768 = vpop.f32.mrf.mxu0
        %1769 = vdwg.mxu0
        %v1770 = vmul.f32 %v1767, 0.70710677
        %v1771 = vand.u32 2147483647, %v1770
        %v1772 = vmul.f32 %v1771, 0.3275911
        %v1773 = vadd.f32 %v1772, 1.0
        %v1774 = vrcp.pop %v1773
        %v1775 = vmul.f32 %v1773, %v1774
        %v1776 = vsub.f32 1.0, %v1775
        %v1777 = vmul.f32 %v1774, %v1776
        %v1778 = vadd.f32 %v1774, %v1777
        %vm1779 = vweird.f32 %v1773
        %vm1780 = vweird.f32 %v1774
        %vm1781 = vmor %vm1779, %vm1780
        %v1782 = vsel %vm1781, %v1774, %v1778
        %v1783 = vand.u32 2147483647, %v1773
        %vm1784 = vcmp.eq.f32.partialorder %v1783, 8.507059e+37
        %v1785 = vand.u32 %v1773, 2147483648
        %v1786 = vor.u32 1.1754944e-38, %v1785
        %v1787 = vsel %vm1784, %v1786, %v1782
        %v1788 = vmul.f32 1.0, %v1787
        %v1789 = vmul.f32 %v1788, 1.0614054
        %v1790 = vadd.f32 %v1789, -1.4531521
        %v1791 = vmul.f32 %v1790, %v1788
        %v1792 = vadd.f32 %v1791, 1.4214138
        %v1793 = vmul.f32 %v1792, %v1788
        %v1794 = vadd.f32 %v1793, -0.28449672
        %v1795 = vmul.f32 %v1794, %v1788
        %v1796 = vadd.f32 %v1795, 0.2548296
        %v1797 = vmul.f32 %v1796, %v1788
        %v1798 = vsub.f32 0.0, %v1771
        %v1799 = vmul.f32 %v1798, %v1771
        %v1800 = vmul.f32 %v1799, 1.442695
        %v1801 = vpow.pop %v1800
        %v1802 = vmul.f32 %v1797, %v1801
        %v1803 = vsub.f32 1.0, %v1802
        %vm1804 = vcmp.ge.f32.partialorder %v1770, 0.0
        %v1805 = vsub.f32 0.0, %v1803
        %v1806 = vsel %vm1804, %v1803, %v1805
        %v1807 = vmul.f32 %v1767, 0.5
        %v1808 = vadd.f32 %v1806, 1.0
        %v1809 = vmul.f32 %v1807, %v1808
        %v1810 = vpack.c.bf16 %v1809, %v1809
        %v1811 = vld [vmem:[%s1182] sm:$0xf]
        %v1812 = vld [vmem:[%s1182 + $0x4] sm:$0xf]
        %v1813 = vld [vmem:[%s1182 + $0x8] sm:$0xf]
        %v1814 = vld [vmem:[%s1182 + $0xc] sm:$0xf]
        %v1815 = vld [vmem:[%s1182 + $0x10] sm:$0xf]
        %v1816 = vld [vmem:[%s1182 + $0x14] sm:$0xf]
        %v1817 = vld [vmem:[%s1182 + $0x18] sm:$0xf]
        %v1818 = vld [vmem:[%s1182 + $0x1c] sm:$0xf]
        %v1827 = vunpack.c.l.b16 %v1811
        %v1828 = vunpack.c.l.b16 %v1812
        %v1829 = vunpack.c.l.b16 %v1813
        %v1830 = vunpack.c.l.b16 %v1814
        %v1831 = vunpack.c.l.b16 %v1815
        %v1832 = vunpack.c.l.b16 %v1816
        %v1833 = vunpack.c.l.b16 %v1817
        %v1834 = vunpack.c.l.b16 %v1818
        %v1835 = vpack.c.b16 %v1828, %v1827
        %v1836 = vpack.c.b16 %v1830, %v1829
        %v1837 = vpack.c.b16 %v1832, %v1831
        %v1838 = vpack.c.b16 %v1834, %v1833
        %vm1843 = vcmask 523264
        %v1845 = vsel %vm1843, %v1810, 0
        %1847 = vmatpush.bf16.msra.mxu0 0
        %1848 = vmatpush.bf16.msra.mxu0 0
        %1849 = vmatpush.bf16.msra.mxu0 0
        %1850 = vmatpush.bf16.msra.mxu0 0
        %1851 = vmatpush.bf16.msra.mxu0 %v1838
        %1852 = vmatpush.bf16.msra.mxu0 %v1837
        %1853 = vmatpush.bf16.msra.mxu0 %v1836
        %1854 = vmatpush.bf16.msra.mxu0 %v1835
        %1855 = vmatmul.bf16.gmra.mxu0 %v1845
        %v1856 = vpop.f32.mrf.mxu0
        %v1857 = vadd.f32 0.0, %v1856
        %v1858 = vpop.f32.mrf.mxu0
        %1859 = vdwg.mxu0
        %v1860 = vadd.f32 %v1700, %v1857
        %v1861 = vld [vmem:[%s1001] sm:$0x1]
        %v1863 = vperm.slane %v1861, 0
        %v1865 = vadd.f32 %v1860, %v1863
        %1866 = vst.msk [vmem:[%s1138] sm:$0xff] %vm1225, %v1865
        %s1867 = sand.u32 %s615, 1
        %s1868 = scalar_lea.sflag [#allocation4], %s1867
        %s1869 = sand.u32 %s615, 1
        %s1870 = smul.addr %s1869, 8
        %s1871 = scalar_lea.vmem [#allocation16], %s1870
        // Predicated region
        $region157: #{transformer_decoder_forward.1} parent=107 // pred_check
          %p1872 = pneg %p625
        $region158: #{transformer_decoder_forward.1} parent=107 // pred_check_branch
          %1874 = sbr.rel (%p1872) target = $region160
        $region159: #{transformer_decoder_forward.1} parent=107 // pred_region
          %1876 = vsyncadd %s1868, 0
          %s1877 = smul.addr %s42, 8
          %s1878 = scalar_lea.hbm %s22, %s1877
          %s1880 = sshll.u32 %s1871, 4
          %s1881 = int_to_ptr.vmem [resolvable:$true] %s1880
          %s1882 = sshll.u32 %s1878, 4
          %s1883 = int_to_ptr.hbm [resolvable:$true] %s1882
          %1885 = dma.vmem_to_hbm [thread:$0]  %s1881, 128, %s1883, %s1868
        $region160: #{transformer_decoder_forward.1} parent=107 // pred_fallthru
          _
      $region108: #{transformer_decoder_forward.1} parent=5 // pred_fallthru
        _
      %p1886 = scmp.le.s32.totalorder 2, %s33
      // Predicated region
      $region161: #{transformer_decoder_forward.1} parent=5 // pred_check
        %p1887 = pneg %p1886
      $region162: #{transformer_decoder_forward.1} parent=5 // pred_check_branch
        %1889 = sbr.rel (%p1887) target = $region164
      $region163: #{transformer_decoder_forward.1} parent=5 // pred_region
        %s1890 = ssub.s32 %s33, 2
        // Predicated region
        $region165: #{transformer_decoder_forward.1} parent=163 // pred_check
          %p1891 = pneg %p631
        $region166: #{transformer_decoder_forward.1} parent=163 // pred_check_branch
          %1893 = sbr.rel (%p1891) target = $region168
        $region167: #{transformer_decoder_forward.1} parent=163 // pred_region
          %s1894 = sand.u32 %s616, 1
          %s1895 = scalar_lea.sflag [#allocation4], %s1894
          %s1896 = sand.u32 %s616, 1
          %s1897 = smul.addr %s1896, 8
          %s1898 = scalar_lea.vmem [#allocation16], %s1897
          %1900 = dma.done %s1895, 128
        $region168: #{transformer_decoder_forward.1} parent=163 // pred_fallthru
          _
      $region164: #{transformer_decoder_forward.1} parent=5 // pred_fallthru
        _
    $region6: #{transformer_decoder_forward.1} parent=1 // loop_footer
      %s37 = sadd.s32 1, %s33
    $region7: #{transformer_decoder_forward.1} parent=1 // loop_footer_branch
      %32 = sbr.rel target = $region3
    $region8: #{transformer_decoder_forward.1} parent=1 // loop_exit
      _
    %1901 = vsyncpa [#allocation3], 1
    %s1902 = scalar_lea.sflag [#allocation3], 1
    %1903 = vsyncpa %s1902, 1
    %1904 = vsyncpa [#allocation6], 1
    %1905 = vsyncpa [#allocation4], 1
    %s1906 = scalar_lea.sflag [#allocation4], 1
    %1907 = vsyncpa %s1906, 1

</llo_original>
